<compile_context>
chip_gen: v7x
topology: tpu7x:2x2x1
jax: 0.10.0
libtpu: 0.0.40
codegen_flags: <defaults>
</compile_context>

<pallas_src>
import functools

import jax
import jax.numpy as jnp
from jax.experimental import pallas as pl
from jax.experimental.pallas import tpu as pltpu

ALPHA = 0.1              # GCN2Conv alpha
LANE = 128               # lane-dense padding unit
DEFAULT_ROW_TILE = 128   # adjacency row-tile height (multiple of 128)


def _round_up(v, m):
    return ((v + m - 1) // m) * m


def _pad_last2(a, rows, cols):
    pads = [(0, 0)] * (a.ndim - 2) + [(0, rows - a.shape[-2]),
                                      (0, cols - a.shape[-1])]
    return jnp.pad(a, pads)


# ------------------------------- kernel ------------------------------------
def gcn2_kernel(x_ref, adj_ref, w1_ref, b1_ref, wc1_ref, wc2_ref,
                w2_ref, b2_ref, emb_ref, out_ref,
                h_bf, x0a, h1_bf, *, alpha, tn):
    """Three-phase, row-tiled forward for one graph of the batch.

    grid = (B, 3, R); phase axis p:
      p == 0 : h[r]  = relu(x[r] @ W1 + b1)                  -> scratch h, alpha*h
      p == 1 : h1[r] = ((1-a) A_hat @ h + a*h)[r] @ Wc1      -> scratch h1
      p == 2 : emb[r] = normalize(((1-a) A_hat @ h1 + a*h)[r] @ Wc2)
               out[r] = emb[r] @ W2 + b2
    adj_ref holds the [TN, Np] adjacency row tile streamed from HBM (already
    scaled by (1-alpha), bf16); h / alpha*h / h1 stay VMEM-resident per graph.
    """
    p = pl.program_id(1)
    r = pl.program_id(2)
    row0 = pl.multiple_of(r * tn, tn)

    @pl.when(p == 0)
    def _lin1():
        h = jnp.dot(x_ref[0], w1_ref[...],
                    preferred_element_type=jnp.float32) + b1_ref[...]
        h = jnp.maximum(h, 0.0)
        # TODO(synk): F.dropout uses torch RNG; identity (eval-mode) here.
        h_bf[pl.ds(row0, tn), :] = h.astype(jnp.bfloat16)
        x0a[pl.ds(row0, tn), :] = alpha * h          # f32 residual term

    @pl.when(p == 1)
    def _conv1():
        agg = jnp.dot(adj_ref[0], h_bf[...], preferred_element_type=jnp.float32)
        h1_in = agg + x0a[pl.ds(row0, tn), :]
        h1 = jnp.dot(h1_in.astype(jnp.bfloat16), wc1_ref[...],
                     preferred_element_type=jnp.float32)
        h1_bf[pl.ds(row0, tn), :] = h1.astype(jnp.bfloat16)

    @pl.when(p == 2)
    def _conv2_norm_lin2():
        agg = jnp.dot(adj_ref[0], h1_bf[...], preferred_element_type=jnp.float32)
        h2_in = agg + x0a[pl.ds(row0, tn), :]
        emb = jnp.dot(h2_in.astype(jnp.bfloat16), wc2_ref[...],
                      preferred_element_type=jnp.float32)
        # F.normalize(p=2, dim=1) == emb * rsqrt(max(sum(emb^2), 1e-24)); rsqrt -> EUP.
        ss = jnp.sum(emb * emb, axis=1, keepdims=True)
        emb_n = emb * jax.lax.rsqrt(jnp.maximum(ss, 1e-24))
        emb_ref[...] = emb_n[None]
        out = jnp.dot(emb_n.astype(jnp.bfloat16), w2_ref[...],
                      preferred_element_type=jnp.float32) + b2_ref[...]
        out_ref[...] = out[None]


# -------------------------- one-time preprocessing --------------------------
def preprocess_adjacency(adj_hat, *, alpha=ALPHA):
    """(1-alpha)*A_hat, zero-padded to lane-dense [B, Np, Np], bf16.
    Call ONCE and reuse across forward calls (removes an O(B*N^2) HBM pass
    per forward).  Zero padding is semantics-preserving."""
    _, N, _ = adj_hat.shape
    Np = _round_up(N, LANE)
    return _pad_last2((1.0 - alpha) * adj_hat, Np, Np).astype(jnp.bfloat16)


def preprocess_params(params):
    """Pad/cast model weights once. Weights bf16 (MXU operands), biases f32.
    Note: for hid >= 256, padding Hp to a multiple of 256 fills the 256-wide
    MXU on v6e/v7x; at small hid the adjacency DMA dominates, so 128 is fine."""
    w1, b1, wc1, wc2, w2, b2 = params
    feat, hid = w1.shape
    out_dim = w2.shape[1]
    Fp = _round_up(feat, LANE)
    Hp = _round_up(hid, LANE)
    Op = _round_up(out_dim, LANE)
    return (_pad_last2(w1, Fp, Hp).astype(jnp.bfloat16),
            _pad_last2(b1, 1, Hp),                        # f32
            _pad_last2(wc1, Hp, Hp).astype(jnp.bfloat16),
            _pad_last2(wc2, Hp, Hp).astype(jnp.bfloat16),
            _pad_last2(w2, Hp, Op).astype(jnp.bfloat16),
            _pad_last2(b2, 1, Op))                        # f32


# ------------------------------- forward ------------------------------------
@functools.partial(jax.jit, static_argnames=("alpha", "row_tile"))
def gcn2_forward(x, adj_p, params_p, *, alpha=ALPHA, row_tile=DEFAULT_ROW_TILE):
    """Batched Pallas forward.

    x        : [B, N, feat] f32 node features (raw).
    adj_p    : output of preprocess_adjacency  [B, Np, Np] bf16.
    params_p : output of preprocess_params.
    Returns PADDED (emb [B, Np, Hp] f32, out [B, Np, Op] f32); slice lazily
    downstream — slicing here would add a full HBM read+write of both outputs.
    """
    w1_p, b1_p, wc1_p, wc2_p, w2_p, b2_p = params_p
    B, _, _ = x.shape
    Np = adj_p.shape[-1]
    Fp, Hp = w1_p.shape
    Op = w2_p.shape[1]
    tn = min(row_tile, Np)
    assert Np % tn == 0, "row tile must divide padded node count"
    R = Np // tn

    x_p = _pad_last2(x, Np, Fp).astype(jnp.bfloat16)

    kernel = functools.partial(gcn2_kernel, alpha=alpha, tn=tn)

    flops = 2 * B * (Np * Fp * Hp + 2 * Np * Np * Hp + 2 * Np * Hp * Hp
                     + Np * Hp * Op)
    bytes_accessed = (x_p.size * 2
                      + 2 * adj_p.size * 2                 # adj streamed in 2 phases
                      + (w1_p.size + wc1_p.size + wc2_p.size + w2_p.size) * 2
                      + (b1_p.size + b2_p.size) * 4
                      + B * Np * (Hp + Op) * 4)            # f32 outputs
    cost = pl.CostEstimate(flops=int(flops), transcendentals=int(B * Np),
                           bytes_accessed=int(bytes_accessed))

    emb_p, out_p = pl.pallas_call(
        kernel,
        out_shape=(jax.ShapeDtypeStruct((B, Np, Hp), jnp.float32),
                   jax.ShapeDtypeStruct((B, Np, Op), jnp.float32)),
        grid=(B, 3, R),
        in_specs=[
            # x row tiles: consumed only in phase 0; index parked at 0 elsewhere
            pl.BlockSpec((1, tn, Fp),
                         lambda b, p, r: (b, jnp.where(p == 0, r, 0), 0)),
            # adjacency row tiles: streamed in phases 1 and 2 only
            pl.BlockSpec((1, tn, Np),
                         lambda b, p, r: (b, jnp.where(p == 0, 0, r), 0)),
            # weights/biases: constant index maps -> stay VMEM-resident
            pl.BlockSpec((Fp, Hp), lambda b, p, r: (0, 0)),   # W_lin1
            pl.BlockSpec((1, Hp), lambda b, p, r: (0, 0)),    # b_lin1
            pl.BlockSpec((Hp, Hp), lambda b, p, r: (0, 0)),   # W_conv1
            pl.BlockSpec((Hp, Hp), lambda b, p, r: (0, 0)),   # W_conv2
            pl.BlockSpec((Hp, Op), lambda b, p, r: (0, 0)),   # W_lin2
            pl.BlockSpec((1, Op), lambda b, p, r: (0, 0)),    # b_lin2
        ],
        out_specs=(
            # written only in phase 2; parking the index in phases 0/1 means
            # every output block is written back to HBM exactly once
            pl.BlockSpec((1, tn, Hp),
                         lambda b, p, r: (b, jnp.where(p == 2, r, 0), 0)),
            pl.BlockSpec((1, tn, Op),
                         lambda b, p, r: (b, jnp.where(p == 2, r, 0), 0)),
        ),
        scratch_shapes=[
            pltpu.VMEM((Np, Hp), jnp.bfloat16),   # h       (MXU operand)
            pltpu.VMEM((Np, Hp), jnp.float32),    # alpha*h (f32 residual)
            pltpu.VMEM((Np, Hp), jnp.bfloat16),   # h1      (MXU operand)
        ],
        compiler_params=pltpu.CompilerParams(
            dimension_semantics=("parallel", "arbitrary", "arbitrary"),
            vmem_limit_bytes=56 * 1024 * 1024),   # raise scoped VMEM; < 64 MiB (v7x)
        cost_estimate=cost,
    )(x_p, adj_p, w1_p, b1_p, wc1_p, wc2_p, w2_p, b2_p)

    return emb_p, out_p


# ------------------------------ glue / demo ---------------------------------
def build_normalized_adjacency(edge_index, num_nodes):
    """gcn_norm: A_hat = D^{-1/2} (A + I) D^{-1/2}  (dense, glue code in JAX)."""
    src, dst = edge_index
    a = jnp.zeros((num_nodes, num_nodes), jnp.float32)
    a = a.at[src, dst].set(1.0)
    a = a.at[dst, src].set(1.0)                       # undirected
    a = a + jnp.eye(num_nodes, dtype=jnp.float32)     # self loops
    deg = jnp.sum(a, axis=1)
    d_inv_sqrt = jnp.where(deg > 0, 1.0 / jnp.sqrt(deg), 0.0)
    return d_inv_sqrt[:, None] * a * d_inv_sqrt[None, :]


def init_params(key, feat_dim, hid_dim, out_dim):
    """Deterministic synthetic parameters (shapes match the nn.Module)."""
    ks = jax.random.split(key, 6)
    w1 = jax.random.normal(ks[0], (feat_dim, hid_dim), jnp.float32) * 0.1
    b1 = jax.random.normal(ks[1], (1, hid_dim), jnp.float32) * 0.01
    wc1 = jax.random.normal(ks[2], (hid_dim, hid_dim), jnp.float32) * 0.1
    wc2 = jax.random.normal(ks[3], (hid_dim, hid_dim), jnp.float32) * 0.1
    w2 = jax.random.normal(ks[4], (hid_dim, out_dim), jnp.float32) * 0.1
    b2 = jax.random.normal(ks[5], (1, out_dim), jnp.float32) * 0.01
    return (w1, b1, wc1, wc2, w2, b2)


def gcn2_reference(x, adj_hat, params, *, alpha=ALPHA):
    """Pure-JAX forward matching the kernel's bf16-operand / f32-accumulate maths."""
    w1, b1, wc1, wc2, w2, b2 = params
    bf = jnp.bfloat16
    mm = lambda a, b: jnp.dot(a.astype(bf), b.astype(bf),
                              preferred_element_type=jnp.float32)

    def single(xg, ag):
        h = jnp.maximum(mm(xg, w1) + b1, 0.0)
        x0a = alpha * h
        a_s = ((1.0 - alpha) * ag).astype(bf)
        agg1 = jnp.dot(a_s, h.astype(bf), preferred_element_type=jnp.float32)
        h1 = mm(agg1 + x0a, wc1)
        agg2 = jnp.dot(a_s, h1.astype(bf), preferred_element_type=jnp.float32)
        emb = mm(agg2 + x0a, wc2)
        emb = emb * jax.lax.rsqrt(
            jnp.maximum(jnp.sum(emb * emb, axis=1, keepdims=True), 1e-24))
        return emb, mm(emb, w2) + b2

    return jax.vmap(single)(x, adj_hat)


if __name__ == "__main__":
    key = jax.random.PRNGKey(0)
    B, N, FEAT, HID, OUT = 2, 200, 8, 32, 4   # N=200 -> Np=256 -> 2 row tiles

    k_x, k_e, k_p = jax.random.split(key, 3)
    x = jax.random.normal(k_x, (B, N, FEAT), jnp.float32)

    # Deterministic small edge lists (ring + chords), one graph per batch entry.
    adjs = []
    for g in range(B):
        kg = jax.random.fold_in(k_e, g)
        ring_src = jnp.arange(N, dtype=jnp.int32)
        ring_dst = (ring_src + 1) % N
        chord_src = jax.random.randint(kg, (32,), 0, N, dtype=jnp.int32)
        chord_dst = (chord_src + 7) % N
        edge_index = (jnp.concatenate([ring_src, chord_src]),
                      jnp.concatenate([ring_dst, chord_dst]))
        adjs.append(build_normalized_adjacency(edge_index, N))
    adj_hat = jnp.stack(adjs)                  # [B, N, N]

    params = init_params(k_p, FEAT, HID, OUT)

    # One-time preprocessing, hoisted out of the per-call forward.
    adj_p = preprocess_adjacency(adj_hat, alpha=ALPHA)
    params_p = preprocess_params(params)

    emb_p, out_p = gcn2_forward(x, adj_p, params_p)
    jax.block_until_ready((emb_p, out_p))

    # Consumer-side unpad (kept out of the kernel wrapper on purpose).
    emb = emb_p[:, :N, :HID]
    logits = out_p[:, :N, :OUT]

    emb_exp, out_exp = gcn2_reference(x, adj_hat, params, alpha=ALPHA)

    assert emb.shape == (B, N, HID) and logits.shape == (B, N, OUT)
    assert bool(jnp.all(jnp.isfinite(emb))) and bool(jnp.all(jnp.isfinite(logits)))
    assert bool(jnp.allclose(emb, emb_exp, atol=1e-2, rtol=1e-2))
    assert bool(jnp.allclose(logits, out_exp, atol=1e-2, rtol=1e-2))
    print("KERNEL_OK")
</pallas_src>

<mosaic_0001>
module attributes {stable_mosaic.version = 11 : i64} {
  func.func @gcn2_kernel(%arg0: i32, %arg1: i32, %arg2: i32, %arg3: memref<1x128x128xbf16, #tpu.memory_space<vmem>>, %arg4: memref<1x128x256xbf16, #tpu.memory_space<vmem>>, %arg5: memref<128x128xbf16, #tpu.memory_space<vmem>>, %arg6: memref<1x128xf32, #tpu.memory_space<vmem>>, %arg7: memref<128x128xbf16, #tpu.memory_space<vmem>>, %arg8: memref<128x128xbf16, #tpu.memory_space<vmem>>, %arg9: memref<128x128xbf16, #tpu.memory_space<vmem>>, %arg10: memref<1x128xf32, #tpu.memory_space<vmem>>, %arg11: memref<1x128x128xf32, #tpu.memory_space<vmem>>, %arg12: memref<1x128x128xf32, #tpu.memory_space<vmem>>, %arg13: memref<256x128xbf16, #tpu.memory_space<vmem>>, %arg14: memref<256x128xf32, #tpu.memory_space<vmem>>, %arg15: memref<256x128xbf16, #tpu.memory_space<vmem>>) attributes {dimension_semantics = [#tpu.dimension_semantics<parallel>, #tpu.dimension_semantics<arbitrary>, #tpu.dimension_semantics<arbitrary>], iteration_bounds = array<i64: 2, 3, 2>, scalar_prefetch = 0 : i64, scratch_operands = 3 : i64, tpu.core_type = #tpu.core_type<tc>, window_params = [{transform_indices = @transform_0, window_bounds = array<i64: 1, 128, 128>}, {transform_indices = @transform_1, window_bounds = array<i64: 1, 128, 256>}, {pipeline_mode = #tpu.pipeline_mode<synchronous>, transform_indices = @transform_2, window_bounds = array<i64: 128, 128>}, {pipeline_mode = #tpu.pipeline_mode<synchronous>, transform_indices = @transform_3, window_bounds = array<i64: 1, 128>}, {pipeline_mode = #tpu.pipeline_mode<synchronous>, transform_indices = @transform_4, window_bounds = array<i64: 128, 128>}, {pipeline_mode = #tpu.pipeline_mode<synchronous>, transform_indices = @transform_5, window_bounds = array<i64: 128, 128>}, {pipeline_mode = #tpu.pipeline_mode<synchronous>, transform_indices = @transform_6, window_bounds = array<i64: 128, 128>}, {pipeline_mode = #tpu.pipeline_mode<synchronous>, transform_indices = @transform_7, window_bounds = array<i64: 1, 128>}, {transform_indices = @transform_8, window_bounds = array<i64: 1, 128, 128>}, {transform_indices = @transform_9, window_bounds = array<i64: 1, 128, 128>}]} {
    %c128_i32 = arith.constant 128 : i32
    %0 = arith.muli %arg2, %c128_i32 : i32
    %1 = tpu.assume_multiple %0, 128 : i32
    %c0_i32 = arith.constant 0 : i32
    %2 = arith.cmpi eq, %arg1, %c0_i32 : i32
    %3 = arith.extui %2 : i1 to i32
    %c0_i32_0 = arith.constant 0 : i32
    %4 = arith.cmpi ne, %3, %c0_i32_0 : i32
    scf.if %4 {
      %c0 = arith.constant 0 : index
      %c0_3 = arith.constant 0 : index
      %c0_4 = arith.constant 0 : index
      %11 = vector.load %arg3[%c0, %c0_3, %c0_4] : memref<1x128x128xbf16, #tpu.memory_space<vmem>>, vector<1x128x128xbf16>
      %12 = vector.shape_cast %11 : vector<1x128x128xbf16> to vector<128x128xbf16>
      %c0_5 = arith.constant 0 : index
      %c0_6 = arith.constant 0 : index
      %13 = vector.load %arg5[%c0_5, %c0_6] : memref<128x128xbf16, #tpu.memory_space<vmem>>, vector<128x128xbf16>
      %cst = arith.constant dense<0.000000e+00> : vector<128x128xf32>
      %14 = tpu.matmul %12, %13, %cst {dimension_numbers = #tpu.dot_dimension_numbers<[1], [0], [0], [1], [0, 0, 1, 1], [], []>} : vector<128x128xbf16>, vector<128x128xbf16>, vector<128x128xf32> -> vector<128x128xf32>
      %c0_7 = arith.constant 0 : index
      %c0_8 = arith.constant 0 : index
      %15 = vector.load %arg6[%c0_7, %c0_8] : memref<1x128xf32, #tpu.memory_space<vmem>>, vector<1x128xf32>
      %16 = vector.broadcast %15 : vector<1x128xf32> to vector<128x128xf32>
      %17 = arith.addf %14, %16 : vector<128x128xf32>
      %cst_9 = arith.constant 0.000000e+00 : f32
      %18 = vector.broadcast %cst_9 : f32 to vector<128x128xf32>
      %19 = arith.maximumf %17, %18 : vector<128x128xf32>
      %20 = arith.truncf %19 : vector<128x128xf32> to vector<128x128xbf16>
      %21 = arith.index_cast %1 : i32 to index
      %c0_10 = arith.constant 0 : index
      %22 = vector.load %arg13[%21, %c0_10] : memref<256x128xbf16, #tpu.memory_space<vmem>>, vector<128x128xbf16>
      tpu.vector_store %arg13[%21, %c0_10], %20 {strides = array<i32>} : memref<256x128xbf16, #tpu.memory_space<vmem>>, vector<128x128xbf16>,
      %cst_11 = arith.constant 1.000000e-01 : f32
      %23 = vector.broadcast %cst_11 : f32 to vector<128x128xf32>
      %24 = arith.mulf %23, %19 : vector<128x128xf32>
      %25 = arith.index_cast %1 : i32 to index
      %c0_12 = arith.constant 0 : index
      %26 = vector.load %arg14[%25, %c0_12] : memref<256x128xf32, #tpu.memory_space<vmem>>, vector<128x128xf32>
      tpu.vector_store %arg14[%25, %c0_12], %24 {strides = array<i32>} : memref<256x128xf32, #tpu.memory_space<vmem>>, vector<128x128xf32>,
    } else {
    }
    %c1_i32 = arith.constant 1 : i32
    %5 = arith.cmpi eq, %arg1, %c1_i32 : i32
    %6 = arith.extui %5 : i1 to i32
    %c0_i32_1 = arith.constant 0 : i32
    %7 = arith.cmpi ne, %6, %c0_i32_1 : i32
    scf.if %7 {
      %c0 = arith.constant 0 : index
      %c0_3 = arith.constant 0 : index
      %c0_4 = arith.constant 0 : index
      %11 = vector.load %arg4[%c0, %c0_3, %c0_4] : memref<1x128x256xbf16, #tpu.memory_space<vmem>>, vector<1x128x256xbf16>
      %12 = vector.shape_cast %11 : vector<1x128x256xbf16> to vector<128x256xbf16>
      %c0_5 = arith.constant 0 : index
      %c0_6 = arith.constant 0 : index
      %13 = vector.load %arg13[%c0_5, %c0_6] : memref<256x128xbf16, #tpu.memory_space<vmem>>, vector<256x128xbf16>
      %cst = arith.constant dense<0.000000e+00> : vector<128x128xf32>
      %14 = tpu.matmul %12, %13, %cst {dimension_numbers = #tpu.dot_dimension_numbers<[1], [0], [0], [1], [0, 0, 1, 1], [], []>} : vector<128x256xbf16>, vector<256x128xbf16>, vector<128x128xf32> -> vector<128x128xf32>
      %15 = arith.index_cast %1 : i32 to index
      %c0_7 = arith.constant 0 : index
      %16 = vector.load %arg14[%15, %c0_7] : memref<256x128xf32, #tpu.memory_space<vmem>>, vector<128x128xf32>
      %17 = arith.addf %14, %16 : vector<128x128xf32>
      %18 = arith.truncf %17 : vector<128x128xf32> to vector<128x128xbf16>
      %c0_8 = arith.constant 0 : index
      %c0_9 = arith.constant 0 : index
      %19 = vector.load %arg7[%c0_8, %c0_9] : memref<128x128xbf16, #tpu.memory_space<vmem>>, vector<128x128xbf16>
      %cst_10 = arith.constant dense<0.000000e+00> : vector<128x128xf32>
      %20 = tpu.matmul %18, %19, %cst_10 {dimension_numbers = #tpu.dot_dimension_numbers<[1], [0], [0], [1], [0, 0, 1, 1], [], []>} : vector<128x128xbf16>, vector<128x128xbf16>, vector<128x128xf32> -> vector<128x128xf32>
      %21 = arith.truncf %20 : vector<128x128xf32> to vector<128x128xbf16>
      %22 = arith.index_cast %1 : i32 to index
      %c0_11 = arith.constant 0 : index
      %23 = vector.load %arg15[%22, %c0_11] : memref<256x128xbf16, #tpu.memory_space<vmem>>, vector<128x128xbf16>
      tpu.vector_store %arg15[%22, %c0_11], %21 {strides = array<i32>} : memref<256x128xbf16, #tpu.memory_space<vmem>>, vector<128x128xbf16>,
    } else {
    }
    %c2_i32 = arith.constant 2 : i32
    %8 = arith.cmpi eq, %arg1, %c2_i32 : i32
    %9 = arith.extui %8 : i1 to i32
    %c0_i32_2 = arith.constant 0 : i32
    %10 = arith.cmpi ne, %9, %c0_i32_2 : i32
    scf.if %10 {
      %c0 = arith.constant 0 : index
      %c0_3 = arith.constant 0 : index
      %c0_4 = arith.constant 0 : index
      %11 = vector.load %arg4[%c0, %c0_3, %c0_4] : memref<1x128x256xbf16, #tpu.memory_space<vmem>>, vector<1x128x256xbf16>
      %12 = vector.shape_cast %11 : vector<1x128x256xbf16> to vector<128x256xbf16>
      %c0_5 = arith.constant 0 : index
      %c0_6 = arith.constant 0 : index
      %13 = vector.load %arg15[%c0_5, %c0_6] : memref<256x128xbf16, #tpu.memory_space<vmem>>, vector<256x128xbf16>
      %cst = arith.constant dense<0.000000e+00> : vector<128x128xf32>
      %14 = tpu.matmul %12, %13, %cst {dimension_numbers = #tpu.dot_dimension_numbers<[1], [0], [0], [1], [0, 0, 1, 1], [], []>} : vector<128x256xbf16>, vector<256x128xbf16>, vector<128x128xf32> -> vector<128x128xf32>
      %15 = arith.index_cast %1 : i32 to index
      %c0_7 = arith.constant 0 : index
      %16 = vector.load %arg14[%15, %c0_7] : memref<256x128xf32, #tpu.memory_space<vmem>>, vector<128x128xf32>
      %17 = arith.addf %14, %16 : vector<128x128xf32>
      %18 = arith.truncf %17 : vector<128x128xf32> to vector<128x128xbf16>
      %c0_8 = arith.constant 0 : index
      %c0_9 = arith.constant 0 : index
      %19 = vector.load %arg8[%c0_8, %c0_9] : memref<128x128xbf16, #tpu.memory_space<vmem>>, vector<128x128xbf16>
      %cst_10 = arith.constant dense<0.000000e+00> : vector<128x128xf32>
      %20 = tpu.matmul %18, %19, %cst_10 {dimension_numbers = #tpu.dot_dimension_numbers<[1], [0], [0], [1], [0, 0, 1, 1], [], []>} : vector<128x128xbf16>, vector<128x128xbf16>, vector<128x128xf32> -> vector<128x128xf32>
      %21 = arith.mulf %20, %20 : vector<128x128xf32>
      %cst_11 = arith.constant dense<0.000000e+00> : vector<128xf32>
      %22 = vector.multi_reduction <add>, %21, %cst_11 [1] : vector<128x128xf32> to vector<128xf32>
      %23 = vector.shape_cast %22 : vector<128xf32> to vector<128x1xf32>
      %cst_12 = arith.constant 1.000000e-24 : f32
      %24 = vector.broadcast %cst_12 : f32 to vector<128x1xf32>
      %25 = arith.maximumf %23, %24 : vector<128x1xf32>
      %26 = math.rsqrt %25 : vector<128x1xf32>
      %27 = vector.broadcast %26 : vector<128x1xf32> to vector<128x128xf32>
      %28 = arith.mulf %20, %27 : vector<128x128xf32>
      %29 = vector.shape_cast %28 : vector<128x128xf32> to vector<1x128x128xf32>
      %c0_13 = arith.constant 0 : index
      %c0_14 = arith.constant 0 : index
      %c0_15 = arith.constant 0 : index
      %30 = vector.load %arg11[%c0_13, %c0_14, %c0_15] : memref<1x128x128xf32, #tpu.memory_space<vmem>>, vector<1x128x128xf32>
      tpu.vector_store %arg11[%c0_13, %c0_14, %c0_15], %29 {strides = array<i32>} : memref<1x128x128xf32, #tpu.memory_space<vmem>>, vector<1x128x128xf32>,
      %31 = arith.truncf %28 : vector<128x128xf32> to vector<128x128xbf16>
      %c0_16 = arith.constant 0 : index
      %c0_17 = arith.constant 0 : index
      %32 = vector.load %arg9[%c0_16, %c0_17] : memref<128x128xbf16, #tpu.memory_space<vmem>>, vector<128x128xbf16>
      %cst_18 = arith.constant dense<0.000000e+00> : vector<128x128xf32>
      %33 = tpu.matmul %31, %32, %cst_18 {dimension_numbers = #tpu.dot_dimension_numbers<[1], [0], [0], [1], [0, 0, 1, 1], [], []>} : vector<128x128xbf16>, vector<128x128xbf16>, vector<128x128xf32> -> vector<128x128xf32>
      %c0_19 = arith.constant 0 : index
      %c0_20 = arith.constant 0 : index
      %34 = vector.load %arg10[%c0_19, %c0_20] : memref<1x128xf32, #tpu.memory_space<vmem>>, vector<1x128xf32>
      %35 = vector.broadcast %34 : vector<1x128xf32> to vector<128x128xf32>
      %36 = arith.addf %33, %35 : vector<128x128xf32>
      %37 = vector.shape_cast %36 : vector<128x128xf32> to vector<1x128x128xf32>
      %c0_21 = arith.constant 0 : index
      %c0_22 = arith.constant 0 : index
      %c0_23 = arith.constant 0 : index
      %38 = vector.load %arg12[%c0_21, %c0_22, %c0_23] : memref<1x128x128xf32, #tpu.memory_space<vmem>>, vector<1x128x128xf32>
      tpu.vector_store %arg12[%c0_21, %c0_22, %c0_23], %37 {strides = array<i32>} : memref<1x128x128xf32, #tpu.memory_space<vmem>>, vector<1x128x128xf32>,
    } else {
    }
    return
  }
  func.func @transform_0(%arg0: i32, %arg1: i32, %arg2: i32) -> (i32, i32, i32) {
    %c0_i32 = arith.constant 0 : i32
    %0 = arith.cmpi eq, %arg1, %c0_i32 : i32
    %c0_i32_0 = arith.constant 0 : i32
    %1 = arith.select %0, %arg2, %c0_i32_0 : i32
    %c0_i32_1 = arith.constant 0 : i32
    %c0_i32_2 = arith.constant 0 : i32
    return %arg0, %1, %c0_i32_1 : i32, i32, i32
  }
  func.func @transform_1(%arg0: i32, %arg1: i32, %arg2: i32) -> (i32, i32, i32) {
    %c0_i32 = arith.constant 0 : i32
    %0 = arith.cmpi eq, %arg1, %c0_i32 : i32
    %c0_i32_0 = arith.constant 0 : i32
    %1 = arith.select %0, %c0_i32_0, %arg2 : i32
    %c0_i32_1 = arith.constant 0 : i32
    %c0_i32_2 = arith.constant 0 : i32
    return %arg0, %1, %c0_i32_1 : i32, i32, i32
  }
  func.func @transform_2(%arg0: i32, %arg1: i32, %arg2: i32) -> (i32, i32) {
    %c0_i32 = arith.constant 0 : i32
    %c0_i32_0 = arith.constant 0 : i32
    %c0_i32_1 = arith.constant 0 : i32
    return %c0_i32, %c0_i32_0 : i32, i32
  }
  func.func @transform_3(%arg0: i32, %arg1: i32, %arg2: i32) -> (i32, i32) {
    %c0_i32 = arith.constant 0 : i32
    %c0_i32_0 = arith.constant 0 : i32
    %c0_i32_1 = arith.constant 0 : i32
    return %c0_i32, %c0_i32_0 : i32, i32
  }
  func.func @transform_4(%arg0: i32, %arg1: i32, %arg2: i32) -> (i32, i32) {
    %c0_i32 = arith.constant 0 : i32
    %c0_i32_0 = arith.constant 0 : i32
    %c0_i32_1 = arith.constant 0 : i32
    return %c0_i32, %c0_i32_0 : i32, i32
  }
  func.func @transform_5(%arg0: i32, %arg1: i32, %arg2: i32) -> (i32, i32) {
    %c0_i32 = arith.constant 0 : i32
    %c0_i32_0 = arith.constant 0 : i32
    %c0_i32_1 = arith.constant 0 : i32
    return %c0_i32, %c0_i32_0 : i32, i32
  }
  func.func @transform_6(%arg0: i32, %arg1: i32, %arg2: i32) -> (i32, i32) {
    %c0_i32 = arith.constant 0 : i32
    %c0_i32_0 = arith.constant 0 : i32
    %c0_i32_1 = arith.constant 0 : i32
    return %c0_i32, %c0_i32_0 : i32, i32
  }
  func.func @transform_7(%arg0: i32, %arg1: i32, %arg2: i32) -> (i32, i32) {
    %c0_i32 = arith.constant 0 : i32
    %c0_i32_0 = arith.constant 0 : i32
    %c0_i32_1 = arith.constant 0 : i32
    return %c0_i32, %c0_i32_0 : i32, i32
  }
  func.func @transform_8(%arg0: i32, %arg1: i32, %arg2: i32) -> (i32, i32, i32) {
    %c2_i32 = arith.constant 2 : i32
    %0 = arith.cmpi eq, %arg1, %c2_i32 : i32
    %c0_i32 = arith.constant 0 : i32
    %1 = arith.select %0, %arg2, %c0_i32 : i32
    %c0_i32_0 = arith.constant 0 : i32
    %c0_i32_1 = arith.constant 0 : i32
    return %arg0, %1, %c0_i32_0 : i32, i32, i32
  }
  func.func @transform_9(%arg0: i32, %arg1: i32, %arg2: i32) -> (i32, i32, i32) {
    %c2_i32 = arith.constant 2 : i32
    %0 = arith.cmpi eq, %arg1, %c2_i32 : i32
    %c0_i32 = arith.constant 0 : i32
    %1 = arith.select %0, %arg2, %c0_i32 : i32
    %c0_i32_0 = arith.constant 0 : i32
    %c0_i32_1 = arith.constant 0 : i32
    return %arg0, %1, %c0_i32_0 : i32, i32, i32
  }
}

</mosaic_0001>

<llo_original>
// kernel: gcn2_forward.1
$region0: #{gcn2_forward.1}
  #allocation0 [shape = 'u32[]', space=smem, size = 0x4, offset = 0x4, fixed_abs, tag = 'smem constant byte address 0x4 - core index']
  #allocation1 [shape = 'u32[144,128]{1,0:T(1,128)}', space=vmem, size = 0x12000, scoped, tag = 'internal scratch']
  #allocation2 [shape = 'bf16[256,128]{1,0:T(16,128)(2,1)}', space=vmem, size = 0x10000, scoped, tag = 'scratch operand']
  #allocation3 [shape = 'f32[256,128]{1,0:T(8,128)}', space=vmem, size = 0x20000, scoped, tag = 'scratch operand']
  #allocation4 [shape = 'bf16[256,128]{1,0:T(16,128)(2,1)}', space=vmem, size = 0x10000, scoped, tag = 'scratch operand']
  %s0 = inlined_call_operand.vmem [shape: bf16[2,256,128], index: 0, kind: input, shape index: {}]
  %s1 = inlined_call_operand.vmem [shape: bf16[2,256,256], index: 1, kind: input, shape index: {}]
  %s2 = inlined_call_operand.vmem [shape: bf16[128,128], index: 2, kind: input, shape index: {}]
  %s3 = inlined_call_operand.vmem [shape: f32[1,128], index: 3, kind: input, shape index: {}]
  %s4 = inlined_call_operand.vmem [shape: bf16[128,128], index: 4, kind: input, shape index: {}]
  %s5 = inlined_call_operand.vmem [shape: bf16[128,128], index: 5, kind: input, shape index: {}]
  %s6 = inlined_call_operand.hbm [shape: bf16[128,128], index: 6, kind: input, shape index: {}]
  %s7 = inlined_call_operand.vmem [shape: f32[1,128], index: 7, kind: input, shape index: {}]
  %s8 = inlined_call_operand.hbm [shape: f32[2,256,128], index: 8, kind: output, shape index: {0}]
  %s9 = inlined_call_operand.hbm [shape: f32[2,256,128], index: 9, kind: output, shape index: {1}]
  %10 = xla_tuple %s8, %s9
  %s11 = sld [smem:[#allocation0]]
  $region89: #{gcn2_forward.1} parent=0
    _
  %s13 = ssub.s32 1, %s11
  %s14 = scalar_select 0, %s13, %s11
  $region1: #{gcn2_forward.1} parent=0
    #allocation5 [shape = 'u8[32768]{0}', space=vmem, size = 0x8000, scoped, tag = 'input window, operand 6, single buffered']
    #allocation6 [shape = 's32[2]{0}', space=sflag, size = 0x8, scoped, tag = 'scoped memory for gcn2_forward.1']
    #allocation7 [shape = 's32[2]{0}', space=sflag, size = 0x8, scoped, tag = 'scoped memory for gcn2_forward.1']
    #allocation8 [shape = 'u8[131072]{0}', space=vmem, size = 0x20000, scoped, tag = 'output window, operand 0']
    #allocation9 [shape = 'u8[131072]{0}', space=vmem, size = 0x20000, scoped, tag = 'output window, operand 1']
    #allocation10 [shape = 's32[2]{0}', space=sflag, size = 0x8, scoped, tag = 'scoped memory for gcn2_forward.1']
    %15 = vsyncpa [#allocation6], 0
    %16 = vsyncpa [#allocation7], 0
    %s17 = scalar_lea.sflag [#allocation7], 1
    %18 = vsyncpa %s17, 0
    %19 = vsyncpa [#allocation10], 0
    %s20 = scalar_lea.sflag [#allocation10], 1
    %21 = vsyncpa %s20, 0
    loop: start=0, step=1, limit=14
    $region2: #{gcn2_forward.1} parent=1 // loop_pre_header
      _
    $region3: #{gcn2_forward.1} parent=1 // loop_header
      %s23 = sphi 0, %s27
      %p24 = scmp.ge.s32.totalorder %s23, 14
      %s30 = sphi 0, %s49
      %s31 = sphi 0, %s45
      %s32 = sphi 0, %s41
      %s33 = sphi 0, %s30
      %s34 = sphi 0, %s31
      %s35 = sphi 0, %s32
      %s36 = sphi 0, %s33
      %s37 = sphi 0, %s34
      %s38 = sphi 0, %s35
      %s58 = sphi 0, %s60
      %s61 = sphi 0, %s58
      %s62 = sphi 0, %s61
      %s78 = sphi 0, %s62
      %s90 = sphi 0, %s92
      %s93 = sphi 0, %s90
      %s94 = sphi 0, %s93
      %s110 = sphi 0, %s94
      %s114 = sphi 0, %s114
      %s116 = sphi 0, %s114
      %s117 = sphi 0, %s116
      %s131 = sphi 0, %s117
      %s135 = sphi 0, %s135
      %s137 = sphi 0, %s135
      %s138 = sphi 0, %s137
      %s152 = sphi 0, %s138
      %s156 = sphi 0, %s156
      %s158 = sphi 0, %s156
      %s159 = sphi 0, %s158
      %s173 = sphi 0, %s159
      %s177 = sphi 0, %s177
      %s179 = sphi 0, %s177
      %s180 = sphi 0, %s179
      %s194 = sphi 0, %s180
      %s198 = sphi 0, %s198
      %s200 = sphi 0, %s198
      %s201 = sphi 0, %s200
      %s215 = sphi 0, %s201
      %s219 = sphi 0, %s219
      %s221 = sphi 0, %s219
      %s222 = sphi 0, %s221
      %s236 = sphi 0, %s222
      %s248 = sphi 0, %s250
      %s251 = sphi 0, %s248
      %s252 = sphi 0, %s251
      %s268 = sphi 0, %s252
      %s280 = sphi 0, %s282
      %s283 = sphi 0, %s280
      %s284 = sphi 0, %s283
      %s300 = sphi 0, %s284
    $region4: #{gcn2_forward.1} parent=1 // loop_header_branch
      %26 = sbr.rel (%p24) target = $region8
    $region5: #{gcn2_forward.1} parent=1 // loop_body
      %s28 = ssub.s32 %s23, 1
      %s29 = ssub.s32 %s23, 2
      %s39 = sadd.s32 1, %s32
      %p40 = scmp.ge.s32.totalorder %s39, 2
      %s41 = scalar_select %p40, 0, %s39
      %s42 = sadd.s32 1, %s31
      %s43 = scalar_select %p40, %s42, %s31
      %p44 = scmp.ge.s32.totalorder %s43, 3
      %s45 = scalar_select %p44, 0, %s43
      %s46 = sadd.s32 1, %s30
      %s47 = scalar_select %p44, %s46, %s30
      %p48 = scmp.ge.s32.totalorder %s47, 2
      %s49 = scalar_select %p48, 0, %s47
      %p50 = scmp.eq.s32.totalorder %s31, 0
      %s51 = scalar_select %p50, %s32, 0
      %p52 = scmp.eq.s32.totalorder %s45, 0
      %s53 = scalar_select %p52, %s41, 0
      %s54 = ssub.s32 %s30, %s49
      %s55 = ssub.s32 %s51, %s53
      %s56 = sor.u32 %s54, %s55
      %p57 = scmp.eq.s32.totalorder %s56, 0
      %s59 = sadd.s32 %s58, 1
      %s60 = scalar_select %p57, %s58, %s59
      %p63 = pneg %p57
      %p64 = scmp.eq.s32.totalorder %s23, 11
      %p65 = por %p63, %p64
      %p66 = scmp.ne.s32.totalorder %s58, %s61
      %p67 = scmp.eq.s32.totalorder %s23, 0
      %p68 = por %p66, %p67
      %p69 = scmp.ne.s32.totalorder %s58, %s61
      %p70 = scmp.eq.s32.totalorder %s28, 11
      %p71 = por %p69, %p70
      %p72 = scmp.ne.s32.totalorder %s61, %s62
      %p73 = scmp.eq.s32.totalorder %s28, 0
      %p74 = por %p72, %p73
      %p75 = scmp.ne.s32.totalorder %s61, %s62
      %p76 = scmp.eq.s32.totalorder %s29, 11
      %p77 = por %p75, %p76
      %p79 = scmp.ne.s32.totalorder %s62, %s78
      %p80 = scmp.eq.s32.totalorder %s29, 0
      %p81 = por %p79, %p80
      %p82 = scmp.eq.s32.totalorder %s31, 0
      %s83 = scalar_select %p82, 0, %s32
      %p84 = scmp.eq.s32.totalorder %s45, 0
      %s85 = scalar_select %p84, 0, %s41
      %s86 = ssub.s32 %s30, %s49
      %s87 = ssub.s32 %s83, %s85
      %s88 = sor.u32 %s86, %s87
      %p89 = scmp.eq.s32.totalorder %s88, 0
      %s91 = sadd.s32 %s90, 1
      %s92 = scalar_select %p89, %s90, %s91
      %p95 = pneg %p89
      %p96 = scmp.eq.s32.totalorder %s23, 11
      %p97 = por %p95, %p96
      %p98 = scmp.ne.s32.totalorder %s90, %s93
      %p99 = scmp.eq.s32.totalorder %s23, 0
      %p100 = por %p98, %p99
      %p101 = scmp.ne.s32.totalorder %s90, %s93
      %p102 = scmp.eq.s32.totalorder %s28, 11
      %p103 = por %p101, %p102
      %p104 = scmp.ne.s32.totalorder %s93, %s94
      %p105 = scmp.eq.s32.totalorder %s28, 0
      %p106 = por %p104, %p105
      %p107 = scmp.ne.s32.totalorder %s93, %s94
      %p108 = scmp.eq.s32.totalorder %s29, 11
      %p109 = por %p107, %p108
      %p111 = scmp.ne.s32.totalorder %s94, %s110
      %p112 = scmp.eq.s32.totalorder %s29, 0
      %p113 = por %p111, %p112
      %s115 = sadd.s32 %s114, 1
      %p118 = scmp.eq.s32.totalorder %s23, 11
      %p119 = scmp.ne.s32.totalorder %s114, %s116
      %p120 = scmp.eq.s32.totalorder %s23, 0
      %p121 = por %p119, %p120
      %p122 = scmp.ne.s32.totalorder %s114, %s116
      %p123 = scmp.eq.s32.totalorder %s28, 11
      %p124 = por %p122, %p123
      %p125 = scmp.ne.s32.totalorder %s116, %s117
      %p126 = scmp.eq.s32.totalorder %s28, 0
      %p127 = por %p125, %p126
      %p128 = scmp.ne.s32.totalorder %s116, %s117
      %p129 = scmp.eq.s32.totalorder %s29, 11
      %p130 = por %p128, %p129
      %p132 = scmp.ne.s32.totalorder %s117, %s131
      %p133 = scmp.eq.s32.totalorder %s29, 0
      %p134 = por %p132, %p133
      %s136 = sadd.s32 %s135, 1
      %p139 = scmp.eq.s32.totalorder %s23, 11
      %p140 = scmp.ne.s32.totalorder %s135, %s137
      %p141 = scmp.eq.s32.totalorder %s23, 0
      %p142 = por %p140, %p141
      %p143 = scmp.ne.s32.totalorder %s135, %s137
      %p144 = scmp.eq.s32.totalorder %s28, 11
      %p145 = por %p143, %p144
      %p146 = scmp.ne.s32.totalorder %s137, %s138
      %p147 = scmp.eq.s32.totalorder %s28, 0
      %p148 = por %p146, %p147
      %p149 = scmp.ne.s32.totalorder %s137, %s138
      %p150 = scmp.eq.s32.totalorder %s29, 11
      %p151 = por %p149, %p150
      %p153 = scmp.ne.s32.totalorder %s138, %s152
      %p154 = scmp.eq.s32.totalorder %s29, 0
      %p155 = por %p153, %p154
      %s157 = sadd.s32 %s156, 1
      %p160 = scmp.eq.s32.totalorder %s23, 11
      %p161 = scmp.ne.s32.totalorder %s156, %s158
      %p162 = scmp.eq.s32.totalorder %s23, 0
      %p163 = por %p161, %p162
      %p164 = scmp.ne.s32.totalorder %s156, %s158
      %p165 = scmp.eq.s32.totalorder %s28, 11
      %p166 = por %p164, %p165
      %p167 = scmp.ne.s32.totalorder %s158, %s159
      %p168 = scmp.eq.s32.totalorder %s28, 0
      %p169 = por %p167, %p168
      %p170 = scmp.ne.s32.totalorder %s158, %s159
      %p171 = scmp.eq.s32.totalorder %s29, 11
      %p172 = por %p170, %p171
      %p174 = scmp.ne.s32.totalorder %s159, %s173
      %p175 = scmp.eq.s32.totalorder %s29, 0
      %p176 = por %p174, %p175
      %s178 = sadd.s32 %s177, 1
      %p181 = scmp.eq.s32.totalorder %s23, 11
      %p182 = scmp.ne.s32.totalorder %s177, %s179
      %p183 = scmp.eq.s32.totalorder %s23, 0
      %p184 = por %p182, %p183
      %p185 = scmp.ne.s32.totalorder %s177, %s179
      %p186 = scmp.eq.s32.totalorder %s28, 11
      %p187 = por %p185, %p186
      %p188 = scmp.ne.s32.totalorder %s179, %s180
      %p189 = scmp.eq.s32.totalorder %s28, 0
      %p190 = por %p188, %p189
      %p191 = scmp.ne.s32.totalorder %s179, %s180
      %p192 = scmp.eq.s32.totalorder %s29, 11
      %p193 = por %p191, %p192
      %p195 = scmp.ne.s32.totalorder %s180, %s194
      %p196 = scmp.eq.s32.totalorder %s29, 0
      %p197 = por %p195, %p196
      %s199 = sadd.s32 %s198, 1
      %p202 = scmp.eq.s32.totalorder %s23, 11
      %p203 = scmp.ne.s32.totalorder %s198, %s200
      %p204 = scmp.eq.s32.totalorder %s23, 0
      %p205 = por %p203, %p204
      %p206 = scmp.ne.s32.totalorder %s198, %s200
      %p207 = scmp.eq.s32.totalorder %s28, 11
      %p208 = por %p206, %p207
      %p209 = scmp.ne.s32.totalorder %s200, %s201
      %p210 = scmp.eq.s32.totalorder %s28, 0
      %p211 = por %p209, %p210
      %p212 = scmp.ne.s32.totalorder %s200, %s201
      %p213 = scmp.eq.s32.totalorder %s29, 11
      %p214 = por %p212, %p213
      %p216 = scmp.ne.s32.totalorder %s201, %s215
      %p217 = scmp.eq.s32.totalorder %s29, 0
      %p218 = por %p216, %p217
      %s220 = sadd.s32 %s219, 1
      %p223 = scmp.eq.s32.totalorder %s23, 11
      %p224 = scmp.ne.s32.totalorder %s219, %s221
      %p225 = scmp.eq.s32.totalorder %s23, 0
      %p226 = por %p224, %p225
      %p227 = scmp.ne.s32.totalorder %s219, %s221
      %p228 = scmp.eq.s32.totalorder %s28, 11
      %p229 = por %p227, %p228
      %p230 = scmp.ne.s32.totalorder %s221, %s222
      %p231 = scmp.eq.s32.totalorder %s28, 0
      %p232 = por %p230, %p231
      %p233 = scmp.ne.s32.totalorder %s221, %s222
      %p234 = scmp.eq.s32.totalorder %s29, 11
      %p235 = por %p233, %p234
      %p237 = scmp.ne.s32.totalorder %s222, %s236
      %p238 = scmp.eq.s32.totalorder %s29, 0
      %p239 = por %p237, %p238
      %p240 = scmp.eq.s32.totalorder %s31, 2
      %s241 = scalar_select %p240, %s32, 0
      %p242 = scmp.eq.s32.totalorder %s45, 2
      %s243 = scalar_select %p242, %s41, 0
      %s244 = ssub.s32 %s30, %s49
      %s245 = ssub.s32 %s241, %s243
      %s246 = sor.u32 %s244, %s245
      %p247 = scmp.eq.s32.totalorder %s246, 0
      %s249 = sadd.s32 %s248, 1
      %s250 = scalar_select %p247, %s248, %s249
      %p253 = pneg %p247
      %p254 = scmp.eq.s32.totalorder %s23, 11
      %p255 = por %p253, %p254
      %p256 = scmp.ne.s32.totalorder %s248, %s251
      %p257 = scmp.eq.s32.totalorder %s23, 0
      %p258 = por %p256, %p257
      %p259 = scmp.ne.s32.totalorder %s248, %s251
      %p260 = scmp.eq.s32.totalorder %s28, 11
      %p261 = por %p259, %p260
      %p262 = scmp.ne.s32.totalorder %s251, %s252
      %p263 = scmp.eq.s32.totalorder %s28, 0
      %p264 = por %p262, %p263
      %p265 = scmp.ne.s32.totalorder %s251, %s252
      %p266 = scmp.eq.s32.totalorder %s29, 11
      %p267 = por %p265, %p266
      %p269 = scmp.ne.s32.totalorder %s252, %s268
      %p270 = scmp.eq.s32.totalorder %s29, 0
      %p271 = por %p269, %p270
      %p272 = scmp.eq.s32.totalorder %s31, 2
      %s273 = scalar_select %p272, %s32, 0
      %p274 = scmp.eq.s32.totalorder %s45, 2
      %s275 = scalar_select %p274, %s41, 0
      %s276 = ssub.s32 %s30, %s49
      %s277 = ssub.s32 %s273, %s275
      %s278 = sor.u32 %s276, %s277
      %p279 = scmp.eq.s32.totalorder %s278, 0
      %s281 = sadd.s32 %s280, 1
      %s282 = scalar_select %p279, %s280, %s281
      %p285 = pneg %p279
      %p286 = scmp.eq.s32.totalorder %s23, 11
      %p287 = por %p285, %p286
      %p288 = scmp.ne.s32.totalorder %s280, %s283
      %p289 = scmp.eq.s32.totalorder %s23, 0
      %p290 = por %p288, %p289
      %p291 = scmp.ne.s32.totalorder %s280, %s283
      %p292 = scmp.eq.s32.totalorder %s28, 11
      %p293 = por %p291, %p292
      %p294 = scmp.ne.s32.totalorder %s283, %s284
      %p295 = scmp.eq.s32.totalorder %s28, 0
      %p296 = por %p294, %p295
      %p297 = scmp.ne.s32.totalorder %s283, %s284
      %p298 = scmp.eq.s32.totalorder %s29, 11
      %p299 = por %p297, %p298
      %p301 = scmp.ne.s32.totalorder %s284, %s300
      %p302 = scmp.eq.s32.totalorder %s29, 0
      %p303 = por %p301, %p302
      %p304 = scmp.le.s32.totalorder 1, %s23
      %p305 = scmp.lt.s32.totalorder %s23, 13
      %p306 = pnand %p304, %p305
      %p307 = pneg %p306
      // Predicated region
      $region9: #{gcn2_forward.1} parent=5 // pred_check
        _
      $region10: #{gcn2_forward.1} parent=5 // pred_check_branch
        %309 = sbr.rel (%p306) target = $region12
      $region11: #{gcn2_forward.1} parent=5 // pred_region
        %s310 = ssub.s32 %s23, 1
        // Predicated region
        $region13: #{gcn2_forward.1} parent=11 // pred_check
          %p311 = pneg %p127
        $region14: #{gcn2_forward.1} parent=11 // pred_check_branch
          %313 = sbr.rel (%p311) target = $region16
        $region15: #{gcn2_forward.1} parent=11 // pred_region
          _
        $region16: #{gcn2_forward.1} parent=11 // pred_fallthru
          _
        // Predicated region
        $region17: #{gcn2_forward.1} parent=11 // pred_check
          %p314 = pneg %p148
        $region18: #{gcn2_forward.1} parent=11 // pred_check_branch
          %316 = sbr.rel (%p314) target = $region20
        $region19: #{gcn2_forward.1} parent=11 // pred_region
          _
        $region20: #{gcn2_forward.1} parent=11 // pred_fallthru
          _
        // Predicated region
        $region21: #{gcn2_forward.1} parent=11 // pred_check
          %p317 = pneg %p169
        $region22: #{gcn2_forward.1} parent=11 // pred_check_branch
          %319 = sbr.rel (%p317) target = $region24
        $region23: #{gcn2_forward.1} parent=11 // pred_region
          _
        $region24: #{gcn2_forward.1} parent=11 // pred_fallthru
          _
        // Predicated region
        $region25: #{gcn2_forward.1} parent=11 // pred_check
          %p320 = pneg %p190
        $region26: #{gcn2_forward.1} parent=11 // pred_check_branch
          %322 = sbr.rel (%p320) target = $region28
        $region27: #{gcn2_forward.1} parent=11 // pred_region
          _
        $region28: #{gcn2_forward.1} parent=11 // pred_fallthru
          _
        // Predicated region
        $region29: #{gcn2_forward.1} parent=11 // pred_check
          %p323 = pneg %p211
        $region30: #{gcn2_forward.1} parent=11 // pred_check_branch
          %325 = sbr.rel (%p323) target = $region32
        $region31: #{gcn2_forward.1} parent=11 // pred_region
          %s327 = ssub.s32 1024, 1024
          %328 = vsyncadd [#allocation6], %s327
          %s329 = sshll.u32 [#allocation5], 4
          %s330 = int_to_ptr.vmem [resolvable:$true] %s329
          %335 = dma.hbm_to_vmem [thread:$0]  %s6, 1024, %s330, [#allocation6], 64, 64, 4
        $region32: #{gcn2_forward.1} parent=11 // pred_fallthru
          _
        // Predicated region
        $region33: #{gcn2_forward.1} parent=11 // pred_check
          %p336 = pneg %p232
        $region34: #{gcn2_forward.1} parent=11 // pred_check_branch
          %338 = sbr.rel (%p336) target = $region36
        $region35: #{gcn2_forward.1} parent=11 // pred_region
          _
        $region36: #{gcn2_forward.1} parent=11 // pred_fallthru
          _
      $region12: #{gcn2_forward.1} parent=5 // pred_fallthru
        _
      %p339 = scmp.lt.s32.totalorder %s23, 12
      // Predicated region
      $region37: #{gcn2_forward.1} parent=5 // pred_check
        %p340 = pneg %p339
      $region38: #{gcn2_forward.1} parent=5 // pred_check_branch
        %342 = sbr.rel (%p340) target = $region40
      $region39: #{gcn2_forward.1} parent=5 // pred_region
        // Predicated region
        $region41: #{gcn2_forward.1} parent=39 // pred_check
          %p343 = pneg %p68
        $region42: #{gcn2_forward.1} parent=39 // pred_check_branch
          %345 = sbr.rel (%p343) target = $region44
        $region43: #{gcn2_forward.1} parent=39 // pred_region
          %p346 = scmp.eq.s32.totalorder %s31, 0
          %s347 = scalar_select %p346, %s32, 0
          %s348 = smul.u32 16, %s347
          %p349 = scmp.lt.s32.totalorder %s30, 1
          %s350 = scalar_select %p349, %s30, 1
          %p351 = scmp.lt.s32.totalorder %s348, 31
          %s352 = scalar_select %p351, %s348, 31
          %s353 = smul.addr %s350, 32
          %s354 = sadd.s32 %s352, %s353
          %s355 = smul.addr %s354, 4
          %s356 = scalar_lea.vmem %s0, %s355
          %p357 = scmp.eq.s32.totalorder %s31, 0
          %s358 = scalar_select %p357, %s32, 0
          %s359 = smul.u32 16, %s358
        $region44: #{gcn2_forward.1} parent=39 // pred_fallthru
          _
        // Predicated region
        $region45: #{gcn2_forward.1} parent=39 // pred_check
          %p360 = pneg %p100
        $region46: #{gcn2_forward.1} parent=39 // pred_check_branch
          %362 = sbr.rel (%p360) target = $region48
        $region47: #{gcn2_forward.1} parent=39 // pred_region
          %p363 = scmp.eq.s32.totalorder %s31, 0
          %s364 = scalar_select %p363, 0, %s32
          %s365 = smul.u32 16, %s364
          %p366 = scmp.lt.s32.totalorder %s30, 1
          %s367 = scalar_select %p366, %s30, 1
          %p368 = scmp.lt.s32.totalorder %s365, 31
          %s369 = scalar_select %p368, %s365, 31
          %s370 = smul.addr %s369, 2
          %s371 = smul.addr %s367, 64
          %s372 = sadd.s32 %s370, %s371
          %s373 = smul.addr %s372, 4
          %s374 = scalar_lea.vmem %s1, %s373
          %p375 = scmp.eq.s32.totalorder %s31, 0
          %s376 = scalar_select %p375, 0, %s32
          %s377 = smul.u32 16, %s376
        $region48: #{gcn2_forward.1} parent=39 // pred_fallthru
          _
      $region40: #{gcn2_forward.1} parent=5 // pred_fallthru
        _
      %p378 = scmp.le.s32.totalorder 1, %s23
      %p379 = scmp.lt.s32.totalorder %s23, 13
      %p380 = pnand %p378, %p379
      %p381 = pneg %p380
      // Predicated region
      $region49: #{gcn2_forward.1} parent=5 // pred_check
        _
      $region50: #{gcn2_forward.1} parent=5 // pred_check_branch
        %383 = sbr.rel (%p380) target = $region52
      $region51: #{gcn2_forward.1} parent=5 // pred_region
        %s384 = ssub.s32 %s23, 1
        // Predicated region
        $region53: #{gcn2_forward.1} parent=51 // pred_check
          %p385 = pneg %p211
        $region54: #{gcn2_forward.1} parent=51 // pred_check_branch
          %387 = sbr.rel (%p385) target = $region56
        $region55: #{gcn2_forward.1} parent=51 // pred_region
          %388 = dma.done [#allocation6], 1024
        $region56: #{gcn2_forward.1} parent=51 // pred_fallthru
          _
        %p389 = scmp.eq.s32.totalorder %s34, 0
        %s390 = scalar_select %p389, %s35, 0
        %s391 = smul.u32 16, %s390
        %p392 = scmp.lt.s32.totalorder %s33, 1
        %s393 = scalar_select %p392, %s33, 1
        %p394 = scmp.lt.s32.totalorder %s391, 31
        %s395 = scalar_select %p394, %s391, 31
        %s396 = smul.addr %s393, 32
        %s397 = sadd.s32 %s395, %s396
        %s398 = smul.addr %s397, 4
        %s399 = scalar_lea.vmem %s0, %s398
        %p400 = pneg %p74
        %p401 = pneg %p71
        %p402 = scmp.eq.s32.totalorder %s34, 0
        %s403 = scalar_select %p402, 0, %s35
        %s404 = smul.u32 16, %s403
        %p405 = scmp.lt.s32.totalorder %s33, 1
        %s406 = scalar_select %p405, %s33, 1
        %p407 = scmp.lt.s32.totalorder %s404, 31
        %s408 = scalar_select %p407, %s404, 31
        %s409 = smul.addr %s408, 2
        %s410 = smul.addr %s406, 64
        %s411 = sadd.s32 %s409, %s410
        %s412 = smul.addr %s411, 4
        %s413 = scalar_lea.vmem %s1, %s412
        %p414 = pneg %p106
        %p415 = pneg %p103
        %p416 = pneg %p127
        %p417 = pneg %p124
        %p418 = pneg %p148
        %p419 = pneg %p145
        %p420 = pneg %p169
        %p421 = pneg %p166
        %p422 = pneg %p190
        %p423 = pneg %p187
        %p424 = pneg %p211
        %p425 = pneg %p208
        %p426 = pneg %p232
        %p427 = pneg %p229
        %p428 = pneg %p264
        %p429 = pneg %p261
        %s430 = sand.u32 %s251, 1
        %s431 = scalar_lea.sflag [#allocation7], %s430
        %s432 = sand.u32 %s251, 1
        %s433 = smul.addr %s432, 128
        %s434 = scalar_lea.vmem [#allocation8], %s433
        %p435 = pneg %p296
        %p436 = pneg %p293
        %s437 = sand.u32 %s283, 1
        %s438 = scalar_lea.sflag [#allocation10], %s437
        %s439 = sand.u32 %s283, 1
        %s440 = smul.addr %s439, 128
        %s441 = scalar_lea.vmem [#allocation9], %s440
        %p442 = scmp.eq.s32.totalorder %s34, 0
        %s443 = scalar_select %p442, %s35, 0
        %s444 = smul.u32 16, %s443
        %p445 = scmp.lt.s32.totalorder %s33, 1
        %s446 = scalar_select %p445, %s33, 1
        %p447 = scmp.lt.s32.totalorder %s444, 31
        %s448 = scalar_select %p447, %s444, 31
        %s449 = smul.addr %s446, 32
        %s450 = sadd.s32 %s448, %s449
        %s451 = smul.addr %s450, 4
        %s452 = scalar_lea.vmem %s0, %s451
        %p453 = scmp.eq.s32.totalorder %s34, 0
        %s454 = scalar_select %p453, %s35, 0
        %s455 = smul.u32 16, %s454
        %p456 = scmp.eq.s32.totalorder %s34, 0
        %s457 = scalar_select %p456, 0, %s35
        %s458 = smul.u32 16, %s457
        %p459 = scmp.lt.s32.totalorder %s33, 1
        %s460 = scalar_select %p459, %s33, 1
        %p461 = scmp.lt.s32.totalorder %s458, 31
        %s462 = scalar_select %p461, %s458, 31
        %s463 = smul.addr %s462, 2
        %s464 = smul.addr %s460, 64
        %s465 = sadd.s32 %s463, %s464
        %s466 = smul.addr %s465, 4
        %s467 = scalar_lea.vmem %s1, %s466
        %p468 = scmp.eq.s32.totalorder %s34, 0
        %s469 = scalar_select %p468, 0, %s35
        %s470 = smul.u32 16, %s469
        %p471 = scmp.eq.s32.totalorder %s34, 2
        %s472 = scalar_select %p471, %s35, 0
        %s473 = smul.u32 16, %s472
        %p474 = scmp.eq.s32.totalorder %s34, 2
        %s475 = scalar_select %p474, %s35, 0
        %s476 = smul.u32 16, %s475
        %s478 = smul.u32 %s35, 128
        %p479 = scmp.eq.s32.totalorder %s34, 0
        // Predicated region
        $region57: #{gcn2_forward.1} parent=51 // pred_check
          %p480 = pneg %p479
        $region58: #{gcn2_forward.1} parent=51 // pred_check_branch
          %482 = sbr.rel (%p480) target = $region60
        $region59: #{gcn2_forward.1} parent=51 // pred_region
          %v483 = vld [vmem:[%s452] sm:$0xf]
          %v484 = vld [vmem:[%s452 + $0x4] sm:$0xf]
          %v485 = vld [vmem:[%s452 + $0x8] sm:$0xf]
          %v486 = vld [vmem:[%s452 + $0xc] sm:$0xf]
          %v487 = vld [vmem:[%s452 + $0x10] sm:$0xf]
          %v488 = vld [vmem:[%s452 + $0x14] sm:$0xf]
          %v489 = vld [vmem:[%s452 + $0x18] sm:$0xf]
          %v490 = vld [vmem:[%s452 + $0x1c] sm:$0xf]
          %v491 = vld [vmem:[%s452 + $0x20] sm:$0xf]
          %v492 = vld [vmem:[%s452 + $0x24] sm:$0xf]
          %v493 = vld [vmem:[%s452 + $0x28] sm:$0xf]
          %v494 = vld [vmem:[%s452 + $0x2c] sm:$0xf]
          %v495 = vld [vmem:[%s452 + $0x30] sm:$0xf]
          %v496 = vld [vmem:[%s452 + $0x34] sm:$0xf]
          %v497 = vld [vmem:[%s452 + $0x38] sm:$0xf]
          %v498 = vld [vmem:[%s452 + $0x3c] sm:$0xf]
          %v499 = vld [vmem:[%s2] sm:$0xf]
          %v500 = vld [vmem:[%s2 + $0x4] sm:$0xf]
          %v501 = vld [vmem:[%s2 + $0x8] sm:$0xf]
          %v502 = vld [vmem:[%s2 + $0xc] sm:$0xf]
          %v503 = vld [vmem:[%s2 + $0x10] sm:$0xf]
          %v504 = vld [vmem:[%s2 + $0x14] sm:$0xf]
          %v505 = vld [vmem:[%s2 + $0x18] sm:$0xf]
          %v506 = vld [vmem:[%s2 + $0x1c] sm:$0xf]
          %v507 = vld [vmem:[%s2 + $0x20] sm:$0xf]
          %v508 = vld [vmem:[%s2 + $0x24] sm:$0xf]
          %v509 = vld [vmem:[%s2 + $0x28] sm:$0xf]
          %v510 = vld [vmem:[%s2 + $0x2c] sm:$0xf]
          %v511 = vld [vmem:[%s2 + $0x30] sm:$0xf]
          %v512 = vld [vmem:[%s2 + $0x34] sm:$0xf]
          %v513 = vld [vmem:[%s2 + $0x38] sm:$0xf]
          %v514 = vld [vmem:[%s2 + $0x3c] sm:$0xf]
          %v515 = vld [vmem:[%s3] sm:$0x1]
          %v517 = vlaneseq
          %v518 = vshrl.u32 %v517, 7
          %v519 = vsub.s32 0, %v518
          %v520 = vrot.slane %v515, %v519
          %v538 = vunpack.c.l.b16 %v483
          %v539 = vunpack.c.l.b16 %v484
          %v540 = vunpack.c.l.b16 %v485
          %v541 = vunpack.c.l.b16 %v486
          %v542 = vunpack.c.l.b16 %v487
          %v543 = vunpack.c.l.b16 %v488
          %v544 = vunpack.c.l.b16 %v489
          %v545 = vunpack.c.l.b16 %v490
          %v546 = vunpack.c.l.b16 %v491
          %v547 = vunpack.c.l.b16 %v492
          %v548 = vunpack.c.l.b16 %v493
          %v549 = vunpack.c.l.b16 %v494
          %v550 = vunpack.c.l.b16 %v495
          %v551 = vunpack.c.l.b16 %v496
          %v552 = vunpack.c.l.b16 %v497
          %v553 = vunpack.c.l.b16 %v498
          %v554 = vpack.c.b16 %v539, %v538
          %v555 = vpack.c.b16 %v541, %v540
          %v556 = vpack.c.b16 %v543, %v542
          %v557 = vpack.c.b16 %v545, %v544
          %v558 = vpack.c.b16 %v547, %v546
          %v559 = vpack.c.b16 %v549, %v548
          %v560 = vpack.c.b16 %v551, %v550
          %v561 = vpack.c.b16 %v553, %v552
          %v586 = vunpack.c.l.b16 %v499
          %v587 = vunpack.c.l.b16 %v500
          %v588 = vunpack.c.l.b16 %v501
          %v589 = vunpack.c.l.b16 %v502
          %v590 = vunpack.c.l.b16 %v503
          %v591 = vunpack.c.l.b16 %v504
          %v592 = vunpack.c.l.b16 %v505
          %v593 = vunpack.c.l.b16 %v506
          %v594 = vunpack.c.l.b16 %v507
          %v595 = vunpack.c.l.b16 %v508
          %v596 = vunpack.c.l.b16 %v509
          %v597 = vunpack.c.l.b16 %v510
          %v598 = vunpack.c.l.b16 %v511
          %v599 = vunpack.c.l.b16 %v512
          %v600 = vunpack.c.l.b16 %v513
          %v601 = vunpack.c.l.b16 %v514
          %v602 = vpack.c.b16 %v587, %v586
          %v603 = vpack.c.b16 %v589, %v588
          %v604 = vpack.c.b16 %v591, %v590
          %v605 = vpack.c.b16 %v593, %v592
          %v606 = vpack.c.b16 %v595, %v594
          %v607 = vpack.c.b16 %v597, %v596
          %v608 = vpack.c.b16 %v599, %v598
          %v609 = vpack.c.b16 %v601, %v600
          %618 = vmatprep.subr.bf16.mxu0 0
          %619 = vmatpush1.bf16.msra.mxu0 %v602
          %620 = vmatprep.subr.bf16.mxu0 0
          %621 = vmatpush1.bf16.msra.mxu0 %v603
          %622 = vmatprep.subr.bf16.mxu0 0
          %623 = vmatpush1.bf16.msra.mxu0 %v604
          %624 = vmatprep.subr.bf16.mxu0 0
          %625 = vmatpush1.bf16.msra.mxu0 %v605
          %626 = vmatprep.subr.bf16.mxu0 0
          %627 = vmatpush1.bf16.msra.mxu0 %v606
          %628 = vmatprep.subr.bf16.mxu0 0
          %629 = vmatpush1.bf16.msra.mxu0 %v607
          %630 = vmatprep.subr.bf16.mxu0 0
          %631 = vmatpush1.bf16.msra.mxu0 %v608
          %632 = vmatprep.subr.bf16.mxu0 0
          %633 = vmatpush1.bf16.msra.mxu0 %v609
          %634 = vmatprep.subr.bf16.mxu0 0
          %635 = vmatpush1.bf16.msra.mxu0 0
          %636 = vmatprep.subr.bf16.mxu0 0
          %637 = vmatpush1.bf16.msra.mxu0 0
          %638 = vmatprep.subr.bf16.mxu0 0
          %639 = vmatpush1.bf16.msra.mxu0 0
          %640 = vmatprep.subr.bf16.mxu0 0
          %641 = vmatpush1.bf16.msra.mxu0 0
          %642 = vmatprep.subr.bf16.mxu0 0
          %643 = vmatpush1.bf16.msra.mxu0 0
          %644 = vmatprep.subr.bf16.mxu0 0
          %645 = vmatpush1.bf16.msra.mxu0 0
          %646 = vmatprep.subr.bf16.mxu0 0
          %647 = vmatpush1.bf16.msra.mxu0 0
          %648 = vmatprep.subr.bf16.mxu0 0
          %649 = vmatpush1.bf16.msra.mxu0 0
          %650 = vmatprep.mubr.bf16.mxu0 0
          %651 = vmatmul.mubr.bf16.gmra.mrb[0].mxu0 %v554
          %v652 = vpop.f32.mrb[0].mxu0
          %v653 = vadd.f32 %v520, %v652
          %v654 = vpop.f32.mrb[0].mxu0
          %v655 = vpop.f32.mrb[0].mxu0
          %v656 = vadd.f32 %v520, %v655
          %v657 = vpop.f32.mrb[0].mxu0
          %658 = vmatprep.mubr.bf16.mxu0 0
          %659 = vmatmul.mubr.bf16.gmra.mrb[0].mxu0 %v555
          %v660 = vpop.f32.mrb[0].mxu0
          %v661 = vadd.f32 %v520, %v660
          %v662 = vpop.f32.mrb[0].mxu0
          %v663 = vpop.f32.mrb[0].mxu0
          %v664 = vadd.f32 %v520, %v663
          %v665 = vpop.f32.mrb[0].mxu0
          %666 = vmatprep.mubr.bf16.mxu0 0
          %667 = vmatmul.mubr.bf16.gmra.mrb[0].mxu0 %v556
          %v668 = vpop.f32.mrb[0].mxu0
          %v669 = vadd.f32 %v520, %v668
          %v670 = vpop.f32.mrb[0].mxu0
          %v671 = vpop.f32.mrb[0].mxu0
          %v672 = vadd.f32 %v520, %v671
          %v673 = vpop.f32.mrb[0].mxu0
          %674 = vmatprep.mubr.bf16.mxu0 0
          %675 = vmatmul.mubr.bf16.gmra.mrb[0].mxu0 %v557
          %v676 = vpop.f32.mrb[0].mxu0
          %v677 = vadd.f32 %v520, %v676
          %v678 = vpop.f32.mrb[0].mxu0
          %v679 = vpop.f32.mrb[0].mxu0
          %v680 = vadd.f32 %v520, %v679
          %v681 = vpop.f32.mrb[0].mxu0
          %682 = vmatprep.mubr.bf16.mxu0 0
          %683 = vmatmul.mubr.bf16.gmra.mrb[0].mxu0 %v558
          %v684 = vpop.f32.mrb[0].mxu0
          %v685 = vadd.f32 %v520, %v684
          %v686 = vpop.f32.mrb[0].mxu0
          %v687 = vpop.f32.mrb[0].mxu0
          %v688 = vadd.f32 %v520, %v687
          %v689 = vpop.f32.mrb[0].mxu0
          %690 = vmatprep.mubr.bf16.mxu0 0
          %691 = vmatmul.mubr.bf16.gmra.mrb[0].mxu0 %v559
          %v692 = vpop.f32.mrb[0].mxu0
          %v693 = vadd.f32 %v520, %v692
          %v694 = vpop.f32.mrb[0].mxu0
          %v695 = vpop.f32.mrb[0].mxu0
          %v696 = vadd.f32 %v520, %v695
          %v697 = vpop.f32.mrb[0].mxu0
          %698 = vmatprep.mubr.bf16.mxu0 0
          %699 = vmatmul.mubr.bf16.gmra.mrb[0].mxu0 %v560
          %v700 = vpop.f32.mrb[0].mxu0
          %v701 = vadd.f32 %v520, %v700
          %v702 = vpop.f32.mrb[0].mxu0
          %v703 = vpop.f32.mrb[0].mxu0
          %v704 = vadd.f32 %v520, %v703
          %v705 = vpop.f32.mrb[0].mxu0
          %706 = vmatprep.mubr.bf16.mxu0 0
          %707 = vmatmul.mubr.bf16.gmra.mrb[0].mxu0 %v561
          %v708 = vpop.f32.mrb[0].mxu0
          %v709 = vadd.f32 %v520, %v708
          %v710 = vpop.f32.mrb[0].mxu0
          %v711 = vpop.f32.mrb[0].mxu0
          %v712 = vadd.f32 %v520, %v711
          %v713 = vpop.f32.mrb[0].mxu0
          %714 = vdwg.mxu0
          %v715 = vmax.f32 %v653, 0.0
          %v716 = vmax.f32 %v656, 0.0
          %v717 = vmax.f32 %v661, 0.0
          %v718 = vmax.f32 %v664, 0.0
          %v719 = vmax.f32 %v669, 0.0
          %v720 = vmax.f32 %v672, 0.0
          %v721 = vmax.f32 %v677, 0.0
          %v722 = vmax.f32 %v680, 0.0
          %v723 = vmax.f32 %v685, 0.0
          %v724 = vmax.f32 %v688, 0.0
          %v725 = vmax.f32 %v693, 0.0
          %v726 = vmax.f32 %v696, 0.0
          %v727 = vmax.f32 %v701, 0.0
          %v728 = vmax.f32 %v704, 0.0
          %v729 = vmax.f32 %v709, 0.0
          %v730 = vmax.f32 %v712, 0.0
          %v731 = vpack.c.bf16 %v716, %v715
          %v732 = vpack.c.bf16 %v718, %v717
          %v733 = vpack.c.bf16 %v720, %v719
          %v734 = vpack.c.bf16 %v722, %v721
          %v735 = vpack.c.bf16 %v724, %v723
          %v736 = vpack.c.bf16 %v726, %v725
          %v737 = vpack.c.bf16 %v728, %v727
          %v738 = vpack.c.bf16 %v730, %v729
          %s739 = sshra.s32 %s478, 4
          %s740 = sand.u32 %s478, 15
          %s741 = smul.addr %s739, 8
          %s742 = scalar_lea.vmem [#allocation2], %s741
          %743 = vst [vmem:[%s742] sm:$0xff] %v731
          %744 = vst [vmem:[%s742 + $0x8] sm:$0xff] %v732
          %745 = vst [vmem:[%s742 + $0x10] sm:$0xff] %v733
          %746 = vst [vmem:[%s742 + $0x18] sm:$0xff] %v734
          %747 = vst [vmem:[%s742 + $0x20] sm:$0xff] %v735
          %748 = vst [vmem:[%s742 + $0x28] sm:$0xff] %v736
          %749 = vst [vmem:[%s742 + $0x30] sm:$0xff] %v737
          %750 = vst [vmem:[%s742 + $0x38] sm:$0xff] %v738
          %v751 = vmul.f32 %v715, 0.1
          %v752 = vmul.f32 %v716, 0.1
          %v753 = vmul.f32 %v717, 0.1
          %v754 = vmul.f32 %v718, 0.1
          %v755 = vmul.f32 %v719, 0.1
          %v756 = vmul.f32 %v720, 0.1
          %v757 = vmul.f32 %v721, 0.1
          %v758 = vmul.f32 %v722, 0.1
          %v759 = vmul.f32 %v723, 0.1
          %v760 = vmul.f32 %v724, 0.1
          %v761 = vmul.f32 %v725, 0.1
          %v762 = vmul.f32 %v726, 0.1
          %v763 = vmul.f32 %v727, 0.1
          %v764 = vmul.f32 %v728, 0.1
          %v765 = vmul.f32 %v729, 0.1
          %v766 = vmul.f32 %v730, 0.1
          %s767 = scalar_lea.vmem [#allocation3], %s478
          %768 = vst [vmem:[%s767] sm:$0xff] %v751
          %769 = vst [vmem:[%s767 + $0x8] sm:$0xff] %v752
          %770 = vst [vmem:[%s767 + $0x10] sm:$0xff] %v753
          %771 = vst [vmem:[%s767 + $0x18] sm:$0xff] %v754
          %772 = vst [vmem:[%s767 + $0x20] sm:$0xff] %v755
          %773 = vst [vmem:[%s767 + $0x28] sm:$0xff] %v756
          %774 = vst [vmem:[%s767 + $0x30] sm:$0xff] %v757
          %775 = vst [vmem:[%s767 + $0x38] sm:$0xff] %v758
          %776 = vst [vmem:[%s767 + $0x40] sm:$0xff] %v759
          %777 = vst [vmem:[%s767 + $0x48] sm:$0xff] %v760
          %778 = vst [vmem:[%s767 + $0x50] sm:$0xff] %v761
          %779 = vst [vmem:[%s767 + $0x58] sm:$0xff] %v762
          %780 = vst [vmem:[%s767 + $0x60] sm:$0xff] %v763
          %781 = vst [vmem:[%s767 + $0x68] sm:$0xff] %v764
          %782 = vst [vmem:[%s767 + $0x70] sm:$0xff] %v765
          %783 = vst [vmem:[%s767 + $0x78] sm:$0xff] %v766
        $region60: #{gcn2_forward.1} parent=51 // pred_fallthru
          _
        %p784 = scmp.eq.s32.totalorder %s34, 1
        // Predicated region
        $region61: #{gcn2_forward.1} parent=51 // pred_check
          %p785 = pneg %p784
        $region62: #{gcn2_forward.1} parent=51 // pred_check_branch
          %787 = sbr.rel (%p785) target = $region64
        $region63: #{gcn2_forward.1} parent=51 // pred_region
          %v788 = vld [vmem:[%s467] sm:$0xff]
          %v789 = vld [vmem:[%s467 + $0x8] sm:$0xff]
          %v790 = vld [vmem:[%s467 + $0x10] sm:$0xff]
          %v791 = vld [vmem:[%s467 + $0x18] sm:$0xff]
          %v792 = vld [vmem:[%s467 + $0x20] sm:$0xff]
          %v793 = vld [vmem:[%s467 + $0x28] sm:$0xff]
          %v794 = vld [vmem:[%s467 + $0x30] sm:$0xff]
          %v795 = vld [vmem:[%s467 + $0x38] sm:$0xff]
          %v796 = vld [vmem:[%s467 + $0x40] sm:$0xff]
          %v797 = vld [vmem:[%s467 + $0x48] sm:$0xff]
          %v798 = vld [vmem:[%s467 + $0x50] sm:$0xff]
          %v799 = vld [vmem:[%s467 + $0x58] sm:$0xff]
          %v800 = vld [vmem:[%s467 + $0x60] sm:$0xff]
          %v801 = vld [vmem:[%s467 + $0x68] sm:$0xff]
          %v802 = vld [vmem:[%s467 + $0x70] sm:$0xff]
          %v803 = vld [vmem:[%s467 + $0x78] sm:$0xff]
          %v804 = vld [vmem:[#allocation2] sm:$0xff]
          %v805 = vld [vmem:[#allocation2 + $0x8] sm:$0xff]
          %v806 = vld [vmem:[#allocation2 + $0x10] sm:$0xff]
          %v807 = vld [vmem:[#allocation2 + $0x18] sm:$0xff]
          %v808 = vld [vmem:[#allocation2 + $0x20] sm:$0xff]
          %v809 = vld [vmem:[#allocation2 + $0x28] sm:$0xff]
          %v810 = vld [vmem:[#allocation2 + $0x30] sm:$0xff]
          %v811 = vld [vmem:[#allocation2 + $0x38] sm:$0xff]
          %v812 = vld [vmem:[#allocation2 + $0x40] sm:$0xff]
          %v813 = vld [vmem:[#allocation2 + $0x48] sm:$0xff]
          %v814 = vld [vmem:[#allocation2 + $0x50] sm:$0xff]
          %v815 = vld [vmem:[#allocation2 + $0x58] sm:$0xff]
          %v816 = vld [vmem:[#allocation2 + $0x60] sm:$0xff]
          %v817 = vld [vmem:[#allocation2 + $0x68] sm:$0xff]
          %v818 = vld [vmem:[#allocation2 + $0x70] sm:$0xff]
          %v819 = vld [vmem:[#allocation2 + $0x78] sm:$0xff]
          %s820 = scalar_lea.vmem [#allocation3], %s478
          %v821 = vld [vmem:[%s820] sm:$0xff]
          %v822 = vld [vmem:[%s820 + $0x8] sm:$0xff]
          %v823 = vld [vmem:[%s820 + $0x10] sm:$0xff]
          %v824 = vld [vmem:[%s820 + $0x18] sm:$0xff]
          %v825 = vld [vmem:[%s820 + $0x20] sm:$0xff]
          %v826 = vld [vmem:[%s820 + $0x28] sm:$0xff]
          %v827 = vld [vmem:[%s820 + $0x30] sm:$0xff]
          %v828 = vld [vmem:[%s820 + $0x38] sm:$0xff]
          %v829 = vld [vmem:[%s820 + $0x40] sm:$0xff]
          %v830 = vld [vmem:[%s820 + $0x48] sm:$0xff]
          %v831 = vld [vmem:[%s820 + $0x50] sm:$0xff]
          %v832 = vld [vmem:[%s820 + $0x58] sm:$0xff]
          %v833 = vld [vmem:[%s820 + $0x60] sm:$0xff]
          %v834 = vld [vmem:[%s820 + $0x68] sm:$0xff]
          %v835 = vld [vmem:[%s820 + $0x70] sm:$0xff]
          %v836 = vld [vmem:[%s820 + $0x78] sm:$0xff]
          %v853 = vunpack.c.l.b16 %v788
          %v854 = vunpack.c.h.b16 %v788
          %v855 = vunpack.c.l.b16 %v789
          %v856 = vunpack.c.h.b16 %v789
          %v857 = vunpack.c.l.b16 %v790
          %v858 = vunpack.c.h.b16 %v790
          %v859 = vunpack.c.l.b16 %v791
          %v860 = vunpack.c.h.b16 %v791
          %v861 = vunpack.c.l.b16 %v792
          %v862 = vunpack.c.h.b16 %v792
          %v863 = vunpack.c.l.b16 %v793
          %v864 = vunpack.c.h.b16 %v793
          %v865 = vunpack.c.l.b16 %v794
          %v866 = vunpack.c.h.b16 %v794
          %v867 = vunpack.c.l.b16 %v795
          %v868 = vunpack.c.h.b16 %v795
          %v869 = vunpack.c.l.b16 %v796
          %v870 = vunpack.c.h.b16 %v796
          %v871 = vunpack.c.l.b16 %v797
          %v872 = vunpack.c.h.b16 %v797
          %v873 = vunpack.c.l.b16 %v798
          %v874 = vunpack.c.h.b16 %v798
          %v875 = vunpack.c.l.b16 %v799
          %v876 = vunpack.c.h.b16 %v799
          %v877 = vunpack.c.l.b16 %v800
          %v878 = vunpack.c.h.b16 %v800
          %v879 = vunpack.c.l.b16 %v801
          %v880 = vunpack.c.h.b16 %v801
          %v881 = vunpack.c.l.b16 %v802
          %v882 = vunpack.c.h.b16 %v802
          %v883 = vunpack.c.l.b16 %v803
          %v884 = vunpack.c.h.b16 %v803
          %v885 = vpack.c.b16 %v855, %v853
          %v886 = vpack.c.b16 %v856, %v854
          %v887 = vpack.c.b16 %v859, %v857
          %v888 = vpack.c.b16 %v860, %v858
          %v889 = vpack.c.b16 %v863, %v861
          %v890 = vpack.c.b16 %v864, %v862
          %v891 = vpack.c.b16 %v867, %v865
          %v892 = vpack.c.b16 %v868, %v866
          %v893 = vpack.c.b16 %v871, %v869
          %v894 = vpack.c.b16 %v872, %v870
          %v895 = vpack.c.b16 %v875, %v873
          %v896 = vpack.c.b16 %v876, %v874
          %v897 = vpack.c.b16 %v879, %v877
          %v898 = vpack.c.b16 %v880, %v878
          %v899 = vpack.c.b16 %v883, %v881
          %v900 = vpack.c.b16 %v884, %v882
          %917 = vmatprep.subr.bf16.mxu0 0
          %918 = vmatpush1.bf16.msra.mxu0 %v804
          %919 = vmatprep.subr.bf16.mxu0 0
          %920 = vmatpush1.bf16.msra.mxu0 %v805
          %921 = vmatprep.subr.bf16.mxu0 0
          %922 = vmatpush1.bf16.msra.mxu0 %v806
          %923 = vmatprep.subr.bf16.mxu0 0
          %924 = vmatpush1.bf16.msra.mxu0 %v807
          %925 = vmatprep.subr.bf16.mxu0 0
          %926 = vmatpush1.bf16.msra.mxu0 %v808
          %927 = vmatprep.subr.bf16.mxu0 0
          %928 = vmatpush1.bf16.msra.mxu0 %v809
          %929 = vmatprep.subr.bf16.mxu0 0
          %930 = vmatpush1.bf16.msra.mxu0 %v810
          %931 = vmatprep.subr.bf16.mxu0 0
          %932 = vmatpush1.bf16.msra.mxu0 %v811
          %933 = vmatprep.subr.bf16.mxu0 0
          %934 = vmatpush1.bf16.msra.mxu0 %v812
          %935 = vmatprep.subr.bf16.mxu0 0
          %936 = vmatpush1.bf16.msra.mxu0 %v813
          %937 = vmatprep.subr.bf16.mxu0 0
          %938 = vmatpush1.bf16.msra.mxu0 %v814
          %939 = vmatprep.subr.bf16.mxu0 0
          %940 = vmatpush1.bf16.msra.mxu0 %v815
          %941 = vmatprep.subr.bf16.mxu0 0
          %942 = vmatpush1.bf16.msra.mxu0 %v816
          %943 = vmatprep.subr.bf16.mxu0 0
          %944 = vmatpush1.bf16.msra.mxu0 %v817
          %945 = vmatprep.subr.bf16.mxu0 0
          %946 = vmatpush1.bf16.msra.mxu0 %v818
          %947 = vmatprep.subr.bf16.mxu0 0
          %948 = vmatpush1.bf16.msra.mxu0 %v819
          %949 = vmatprep.mubr.bf16.mxu0 %v886
          %950 = vmatmul.mubr.bf16.gmra.mrb[0].mxu0 %v885
          %v951 = vpop.f32.mrb[0].mxu0
          %v952 = vadd.f32 %v821, %v951
          %v953 = vpop.f32.mrb[0].mxu0
          %v954 = vpop.f32.mrb[0].mxu0
          %v955 = vadd.f32 %v822, %v954
          %v956 = vpop.f32.mrb[0].mxu0
          %957 = vmatprep.mubr.bf16.mxu0 %v888
          %958 = vmatmul.mubr.bf16.gmra.mrb[0].mxu0 %v887
          %v959 = vpop.f32.mrb[0].mxu0
          %v960 = vadd.f32 %v823, %v959
          %v961 = vpop.f32.mrb[0].mxu0
          %v962 = vpop.f32.mrb[0].mxu0
          %v963 = vadd.f32 %v824, %v962
          %v964 = vpop.f32.mrb[0].mxu0
          %965 = vmatprep.mubr.bf16.mxu0 %v890
          %966 = vmatmul.mubr.bf16.gmra.mrb[0].mxu0 %v889
          %v967 = vpop.f32.mrb[0].mxu0
          %v968 = vadd.f32 %v825, %v967
          %v969 = vpop.f32.mrb[0].mxu0
          %v970 = vpop.f32.mrb[0].mxu0
          %v971 = vadd.f32 %v826, %v970
          %v972 = vpop.f32.mrb[0].mxu0
          %973 = vmatprep.mubr.bf16.mxu0 %v892
          %974 = vmatmul.mubr.bf16.gmra.mrb[0].mxu0 %v891
          %v975 = vpop.f32.mrb[0].mxu0
          %v976 = vadd.f32 %v827, %v975
          %v977 = vpop.f32.mrb[0].mxu0
          %v978 = vpop.f32.mrb[0].mxu0
          %v979 = vadd.f32 %v828, %v978
          %v980 = vpop.f32.mrb[0].mxu0
          %981 = vmatprep.mubr.bf16.mxu0 %v894
          %982 = vmatmul.mubr.bf16.gmra.mrb[0].mxu0 %v893
          %v983 = vpop.f32.mrb[0].mxu0
          %v984 = vadd.f32 %v829, %v983
          %v985 = vpop.f32.mrb[0].mxu0
          %v986 = vpop.f32.mrb[0].mxu0
          %v987 = vadd.f32 %v830, %v986
          %v988 = vpop.f32.mrb[0].mxu0
          %989 = vmatprep.mubr.bf16.mxu0 %v896
          %990 = vmatmul.mubr.bf16.gmra.mrb[0].mxu0 %v895
          %v991 = vpop.f32.mrb[0].mxu0
          %v992 = vadd.f32 %v831, %v991
          %v993 = vpop.f32.mrb[0].mxu0
          %v994 = vpop.f32.mrb[0].mxu0
          %v995 = vadd.f32 %v832, %v994
          %v996 = vpop.f32.mrb[0].mxu0
          %997 = vmatprep.mubr.bf16.mxu0 %v898
          %998 = vmatmul.mubr.bf16.gmra.mrb[0].mxu0 %v897
          %v999 = vpop.f32.mrb[0].mxu0
          %v1000 = vadd.f32 %v833, %v999
          %v1001 = vpop.f32.mrb[0].mxu0
          %v1002 = vpop.f32.mrb[0].mxu0
          %v1003 = vadd.f32 %v834, %v1002
          %v1004 = vpop.f32.mrb[0].mxu0
          %1005 = vmatprep.mubr.bf16.mxu0 %v900
          %1006 = vmatmul.mubr.bf16.gmra.mrb[0].mxu0 %v899
          %v1007 = vpop.f32.mrb[0].mxu0
          %v1008 = vadd.f32 %v835, %v1007
          %v1009 = vpop.f32.mrb[0].mxu0
          %v1010 = vpop.f32.mrb[0].mxu0
          %v1011 = vadd.f32 %v836, %v1010
          %v1012 = vpop.f32.mrb[0].mxu0
          %1013 = vdwg.mxu0
          %v1014 = vpack.c.bf16 %v955, %v952
          %v1015 = vpack.c.bf16 %v963, %v960
          %v1016 = vpack.c.bf16 %v971, %v968
          %v1017 = vpack.c.bf16 %v979, %v976
          %v1018 = vpack.c.bf16 %v987, %v984
          %v1019 = vpack.c.bf16 %v995, %v992
          %v1020 = vpack.c.bf16 %v1003, %v1000
          %v1021 = vpack.c.bf16 %v1011, %v1008
          %v1022 = vld [vmem:[%s4] sm:$0xf]
          %v1023 = vld [vmem:[%s4 + $0x4] sm:$0xf]
          %v1024 = vld [vmem:[%s4 + $0x8] sm:$0xf]
          %v1025 = vld [vmem:[%s4 + $0xc] sm:$0xf]
          %v1026 = vld [vmem:[%s4 + $0x10] sm:$0xf]
          %v1027 = vld [vmem:[%s4 + $0x14] sm:$0xf]
          %v1028 = vld [vmem:[%s4 + $0x18] sm:$0xf]
          %v1029 = vld [vmem:[%s4 + $0x1c] sm:$0xf]
          %v1030 = vld [vmem:[%s4 + $0x20] sm:$0xf]
          %v1031 = vld [vmem:[%s4 + $0x24] sm:$0xf]
          %v1032 = vld [vmem:[%s4 + $0x28] sm:$0xf]
          %v1033 = vld [vmem:[%s4 + $0x2c] sm:$0xf]
          %v1034 = vld [vmem:[%s4 + $0x30] sm:$0xf]
          %v1035 = vld [vmem:[%s4 + $0x34] sm:$0xf]
          %v1036 = vld [vmem:[%s4 + $0x38] sm:$0xf]
          %v1037 = vld [vmem:[%s4 + $0x3c] sm:$0xf]
          %v1054 = vunpack.c.l.b16 %v1022
          %v1055 = vunpack.c.l.b16 %v1023
          %v1056 = vunpack.c.l.b16 %v1024
          %v1057 = vunpack.c.l.b16 %v1025
          %v1058 = vunpack.c.l.b16 %v1026
          %v1059 = vunpack.c.l.b16 %v1027
          %v1060 = vunpack.c.l.b16 %v1028
          %v1061 = vunpack.c.l.b16 %v1029
          %v1062 = vunpack.c.l.b16 %v1030
          %v1063 = vunpack.c.l.b16 %v1031
          %v1064 = vunpack.c.l.b16 %v1032
          %v1065 = vunpack.c.l.b16 %v1033
          %v1066 = vunpack.c.l.b16 %v1034
          %v1067 = vunpack.c.l.b16 %v1035
          %v1068 = vunpack.c.l.b16 %v1036
          %v1069 = vunpack.c.l.b16 %v1037
          %v1070 = vpack.c.b16 %v1055, %v1054
          %v1071 = vpack.c.b16 %v1057, %v1056
          %v1072 = vpack.c.b16 %v1059, %v1058
          %v1073 = vpack.c.b16 %v1061, %v1060
          %v1074 = vpack.c.b16 %v1063, %v1062
          %v1075 = vpack.c.b16 %v1065, %v1064
          %v1076 = vpack.c.b16 %v1067, %v1066
          %v1077 = vpack.c.b16 %v1069, %v1068
          %1086 = vmatprep.subr.bf16.mxu0 0
          %1087 = vmatpush1.bf16.msra.mxu0 %v1070
          %1088 = vmatprep.subr.bf16.mxu0 0
          %1089 = vmatpush1.bf16.msra.mxu0 %v1071
          %1090 = vmatprep.subr.bf16.mxu0 0
          %1091 = vmatpush1.bf16.msra.mxu0 %v1072
          %1092 = vmatprep.subr.bf16.mxu0 0
          %1093 = vmatpush1.bf16.msra.mxu0 %v1073
          %1094 = vmatprep.subr.bf16.mxu0 0
          %1095 = vmatpush1.bf16.msra.mxu0 %v1074
          %1096 = vmatprep.subr.bf16.mxu0 0
          %1097 = vmatpush1.bf16.msra.mxu0 %v1075
          %1098 = vmatprep.subr.bf16.mxu0 0
          %1099 = vmatpush1.bf16.msra.mxu0 %v1076
          %1100 = vmatprep.subr.bf16.mxu0 0
          %1101 = vmatpush1.bf16.msra.mxu0 %v1077
          %1102 = vmatprep.subr.bf16.mxu0 0
          %1103 = vmatpush1.bf16.msra.mxu0 0
          %1104 = vmatprep.subr.bf16.mxu0 0
          %1105 = vmatpush1.bf16.msra.mxu0 0
          %1106 = vmatprep.subr.bf16.mxu0 0
          %1107 = vmatpush1.bf16.msra.mxu0 0
          %1108 = vmatprep.subr.bf16.mxu0 0
          %1109 = vmatpush1.bf16.msra.mxu0 0
          %1110 = vmatprep.subr.bf16.mxu0 0
          %1111 = vmatpush1.bf16.msra.mxu0 0
          %1112 = vmatprep.subr.bf16.mxu0 0
          %1113 = vmatpush1.bf16.msra.mxu0 0
          %1114 = vmatprep.subr.bf16.mxu0 0
          %1115 = vmatpush1.bf16.msra.mxu0 0
          %1116 = vmatprep.subr.bf16.mxu0 0
          %1117 = vmatpush1.bf16.msra.mxu0 0
          %1118 = vmatprep.mubr.bf16.mxu0 0
          %1119 = vmatmul.mubr.bf16.gmra.mrb[0].mxu0 %v1014
          %v1120 = vpop.f32.mrb[0].mxu0
          %v1121 = vadd.f32 0.0, %v1120
          %v1122 = vpop.f32.mrb[0].mxu0
          %v1123 = vpop.f32.mrb[0].mxu0
          %v1124 = vadd.f32 0.0, %v1123
          %v1125 = vpop.f32.mrb[0].mxu0
          %1126 = vmatprep.mubr.bf16.mxu0 0
          %1127 = vmatmul.mubr.bf16.gmra.mrb[0].mxu0 %v1015
          %v1128 = vpop.f32.mrb[0].mxu0
          %v1129 = vadd.f32 0.0, %v1128
          %v1130 = vpop.f32.mrb[0].mxu0
          %v1131 = vpop.f32.mrb[0].mxu0
          %v1132 = vadd.f32 0.0, %v1131
          %v1133 = vpop.f32.mrb[0].mxu0
          %1134 = vmatprep.mubr.bf16.mxu0 0
          %1135 = vmatmul.mubr.bf16.gmra.mrb[0].mxu0 %v1016
          %v1136 = vpop.f32.mrb[0].mxu0
          %v1137 = vadd.f32 0.0, %v1136
          %v1138 = vpop.f32.mrb[0].mxu0
          %v1139 = vpop.f32.mrb[0].mxu0
          %v1140 = vadd.f32 0.0, %v1139
          %v1141 = vpop.f32.mrb[0].mxu0
          %1142 = vmatprep.mubr.bf16.mxu0 0
          %1143 = vmatmul.mubr.bf16.gmra.mrb[0].mxu0 %v1017
          %v1144 = vpop.f32.mrb[0].mxu0
          %v1145 = vadd.f32 0.0, %v1144
          %v1146 = vpop.f32.mrb[0].mxu0
          %v1147 = vpop.f32.mrb[0].mxu0
          %v1148 = vadd.f32 0.0, %v1147
          %v1149 = vpop.f32.mrb[0].mxu0
          %1150 = vmatprep.mubr.bf16.mxu0 0
          %1151 = vmatmul.mubr.bf16.gmra.mrb[0].mxu0 %v1018
          %v1152 = vpop.f32.mrb[0].mxu0
          %v1153 = vadd.f32 0.0, %v1152
          %v1154 = vpop.f32.mrb[0].mxu0
          %v1155 = vpop.f32.mrb[0].mxu0
          %v1156 = vadd.f32 0.0, %v1155
          %v1157 = vpop.f32.mrb[0].mxu0
          %1158 = vmatprep.mubr.bf16.mxu0 0
          %1159 = vmatmul.mubr.bf16.gmra.mrb[0].mxu0 %v1019
          %v1160 = vpop.f32.mrb[0].mxu0
          %v1161 = vadd.f32 0.0, %v1160
          %v1162 = vpop.f32.mrb[0].mxu0
          %v1163 = vpop.f32.mrb[0].mxu0
          %v1164 = vadd.f32 0.0, %v1163
          %v1165 = vpop.f32.mrb[0].mxu0
          %1166 = vmatprep.mubr.bf16.mxu0 0
          %1167 = vmatmul.mubr.bf16.gmra.mrb[0].mxu0 %v1020
          %v1168 = vpop.f32.mrb[0].mxu0
          %v1169 = vadd.f32 0.0, %v1168
          %v1170 = vpop.f32.mrb[0].mxu0
          %v1171 = vpop.f32.mrb[0].mxu0
          %v1172 = vadd.f32 0.0, %v1171
          %v1173 = vpop.f32.mrb[0].mxu0
          %1174 = vmatprep.mubr.bf16.mxu0 0
          %1175 = vmatmul.mubr.bf16.gmra.mrb[0].mxu0 %v1021
          %v1176 = vpop.f32.mrb[0].mxu0
          %v1177 = vadd.f32 0.0, %v1176
          %v1178 = vpop.f32.mrb[0].mxu0
          %v1179 = vpop.f32.mrb[0].mxu0
          %v1180 = vadd.f32 0.0, %v1179
          %v1181 = vpop.f32.mrb[0].mxu0
          %1182 = vdwg.mxu0
          %v1183 = vpack.c.bf16 %v1124, %v1121
          %v1184 = vpack.c.bf16 %v1132, %v1129
          %v1185 = vpack.c.bf16 %v1140, %v1137
          %v1186 = vpack.c.bf16 %v1148, %v1145
          %v1187 = vpack.c.bf16 %v1156, %v1153
          %v1188 = vpack.c.bf16 %v1164, %v1161
          %v1189 = vpack.c.bf16 %v1172, %v1169
          %v1190 = vpack.c.bf16 %v1180, %v1177
          %s1191 = sshra.s32 %s478, 4
          %s1192 = sand.u32 %s478, 15
          %s1193 = smul.addr %s1191, 8
          %s1194 = scalar_lea.vmem [#allocation4], %s1193
          %1195 = vst [vmem:[%s1194] sm:$0xff] %v1183
          %1196 = vst [vmem:[%s1194 + $0x8] sm:$0xff] %v1184
          %1197 = vst [vmem:[%s1194 + $0x10] sm:$0xff] %v1185
          %1198 = vst [vmem:[%s1194 + $0x18] sm:$0xff] %v1186
          %1199 = vst [vmem:[%s1194 + $0x20] sm:$0xff] %v1187
          %1200 = vst [vmem:[%s1194 + $0x28] sm:$0xff] %v1188
          %1201 = vst [vmem:[%s1194 + $0x30] sm:$0xff] %v1189
          %1202 = vst [vmem:[%s1194 + $0x38] sm:$0xff] %v1190
        $region64: #{gcn2_forward.1} parent=51 // pred_fallthru
          _
        %p1203 = scmp.eq.s32.totalorder %s34, 2
        // Predicated region
        $region65: #{gcn2_forward.1} parent=51 // pred_check
          %p1204 = pneg %p1203
        $region66: #{gcn2_forward.1} parent=51 // pred_check_branch
          %1206 = sbr.rel (%p1204) target = $region68
        $region67: #{gcn2_forward.1} parent=51 // pred_region
          %v1207 = vld [vmem:[%s467] sm:$0xff]
          %v1208 = vld [vmem:[%s467 + $0x8] sm:$0xff]
          %v1209 = vld [vmem:[%s467 + $0x10] sm:$0xff]
          %v1210 = vld [vmem:[%s467 + $0x18] sm:$0xff]
          %v1211 = vld [vmem:[%s467 + $0x20] sm:$0xff]
          %v1212 = vld [vmem:[%s467 + $0x28] sm:$0xff]
          %v1213 = vld [vmem:[%s467 + $0x30] sm:$0xff]
          %v1214 = vld [vmem:[%s467 + $0x38] sm:$0xff]
          %v1215 = vld [vmem:[%s467 + $0x40] sm:$0xff]
          %v1216 = vld [vmem:[%s467 + $0x48] sm:$0xff]
          %v1217 = vld [vmem:[%s467 + $0x50] sm:$0xff]
          %v1218 = vld [vmem:[%s467 + $0x58] sm:$0xff]
          %v1219 = vld [vmem:[%s467 + $0x60] sm:$0xff]
          %v1220 = vld [vmem:[%s467 + $0x68] sm:$0xff]
          %v1221 = vld [vmem:[%s467 + $0x70] sm:$0xff]
          %v1222 = vld [vmem:[%s467 + $0x78] sm:$0xff]
          %v1223 = vld [vmem:[#allocation4] sm:$0xff]
          %v1224 = vld [vmem:[#allocation4 + $0x8] sm:$0xff]
          %v1225 = vld [vmem:[#allocation4 + $0x10] sm:$0xff]
          %v1226 = vld [vmem:[#allocation4 + $0x18] sm:$0xff]
          %v1227 = vld [vmem:[#allocation4 + $0x20] sm:$0xff]
          %v1228 = vld [vmem:[#allocation4 + $0x28] sm:$0xff]
          %v1229 = vld [vmem:[#allocation4 + $0x30] sm:$0xff]
          %v1230 = vld [vmem:[#allocation4 + $0x38] sm:$0xff]
          %v1231 = vld [vmem:[#allocation4 + $0x40] sm:$0xff]
          %v1232 = vld [vmem:[#allocation4 + $0x48] sm:$0xff]
          %v1233 = vld [vmem:[#allocation4 + $0x50] sm:$0xff]
          %v1234 = vld [vmem:[#allocation4 + $0x58] sm:$0xff]
          %v1235 = vld [vmem:[#allocation4 + $0x60] sm:$0xff]
          %v1236 = vld [vmem:[#allocation4 + $0x68] sm:$0xff]
          %v1237 = vld [vmem:[#allocation4 + $0x70] sm:$0xff]
          %v1238 = vld [vmem:[#allocation4 + $0x78] sm:$0xff]
          %s1239 = scalar_lea.vmem [#allocation3], %s478
          %v1240 = vld [vmem:[%s1239] sm:$0xff]
          %v1241 = vld [vmem:[%s1239 + $0x8] sm:$0xff]
          %v1242 = vld [vmem:[%s1239 + $0x10] sm:$0xff]
          %v1243 = vld [vmem:[%s1239 + $0x18] sm:$0xff]
          %v1244 = vld [vmem:[%s1239 + $0x20] sm:$0xff]
          %v1245 = vld [vmem:[%s1239 + $0x28] sm:$0xff]
          %v1246 = vld [vmem:[%s1239 + $0x30] sm:$0xff]
          %v1247 = vld [vmem:[%s1239 + $0x38] sm:$0xff]
          %v1248 = vld [vmem:[%s1239 + $0x40] sm:$0xff]
          %v1249 = vld [vmem:[%s1239 + $0x48] sm:$0xff]
          %v1250 = vld [vmem:[%s1239 + $0x50] sm:$0xff]
          %v1251 = vld [vmem:[%s1239 + $0x58] sm:$0xff]
          %v1252 = vld [vmem:[%s1239 + $0x60] sm:$0xff]
          %v1253 = vld [vmem:[%s1239 + $0x68] sm:$0xff]
          %v1254 = vld [vmem:[%s1239 + $0x70] sm:$0xff]
          %v1255 = vld [vmem:[%s1239 + $0x78] sm:$0xff]
          %v1272 = vunpack.c.l.b16 %v1207
          %v1273 = vunpack.c.h.b16 %v1207
          %v1274 = vunpack.c.l.b16 %v1208
          %v1275 = vunpack.c.h.b16 %v1208
          %v1276 = vunpack.c.l.b16 %v1209
          %v1277 = vunpack.c.h.b16 %v1209
          %v1278 = vunpack.c.l.b16 %v1210
          %v1279 = vunpack.c.h.b16 %v1210
          %v1280 = vunpack.c.l.b16 %v1211
          %v1281 = vunpack.c.h.b16 %v1211
          %v1282 = vunpack.c.l.b16 %v1212
          %v1283 = vunpack.c.h.b16 %v1212
          %v1284 = vunpack.c.l.b16 %v1213
          %v1285 = vunpack.c.h.b16 %v1213
          %v1286 = vunpack.c.l.b16 %v1214
          %v1287 = vunpack.c.h.b16 %v1214
          %v1288 = vunpack.c.l.b16 %v1215
          %v1289 = vunpack.c.h.b16 %v1215
          %v1290 = vunpack.c.l.b16 %v1216
          %v1291 = vunpack.c.h.b16 %v1216
          %v1292 = vunpack.c.l.b16 %v1217
          %v1293 = vunpack.c.h.b16 %v1217
          %v1294 = vunpack.c.l.b16 %v1218
          %v1295 = vunpack.c.h.b16 %v1218
          %v1296 = vunpack.c.l.b16 %v1219
          %v1297 = vunpack.c.h.b16 %v1219
          %v1298 = vunpack.c.l.b16 %v1220
          %v1299 = vunpack.c.h.b16 %v1220
          %v1300 = vunpack.c.l.b16 %v1221
          %v1301 = vunpack.c.h.b16 %v1221
          %v1302 = vunpack.c.l.b16 %v1222
          %v1303 = vunpack.c.h.b16 %v1222
          %v1304 = vpack.c.b16 %v1274, %v1272
          %v1305 = vpack.c.b16 %v1275, %v1273
          %v1306 = vpack.c.b16 %v1278, %v1276
          %v1307 = vpack.c.b16 %v1279, %v1277
          %v1308 = vpack.c.b16 %v1282, %v1280
          %v1309 = vpack.c.b16 %v1283, %v1281
          %v1310 = vpack.c.b16 %v1286, %v1284
          %v1311 = vpack.c.b16 %v1287, %v1285
          %v1312 = vpack.c.b16 %v1290, %v1288
          %v1313 = vpack.c.b16 %v1291, %v1289
          %v1314 = vpack.c.b16 %v1294, %v1292
          %v1315 = vpack.c.b16 %v1295, %v1293
          %v1316 = vpack.c.b16 %v1298, %v1296
          %v1317 = vpack.c.b16 %v1299, %v1297
          %v1318 = vpack.c.b16 %v1302, %v1300
          %v1319 = vpack.c.b16 %v1303, %v1301
          %1336 = vmatprep.subr.bf16.mxu0 0
          %1337 = vmatpush1.bf16.msra.mxu0 %v1223
          %1338 = vmatprep.subr.bf16.mxu0 0
          %1339 = vmatpush1.bf16.msra.mxu0 %v1224
          %1340 = vmatprep.subr.bf16.mxu0 0
          %1341 = vmatpush1.bf16.msra.mxu0 %v1225
          %1342 = vmatprep.subr.bf16.mxu0 0
          %1343 = vmatpush1.bf16.msra.mxu0 %v1226
          %1344 = vmatprep.subr.bf16.mxu0 0
          %1345 = vmatpush1.bf16.msra.mxu0 %v1227
          %1346 = vmatprep.subr.bf16.mxu0 0
          %1347 = vmatpush1.bf16.msra.mxu0 %v1228
          %1348 = vmatprep.subr.bf16.mxu0 0
          %1349 = vmatpush1.bf16.msra.mxu0 %v1229
          %1350 = vmatprep.subr.bf16.mxu0 0
          %1351 = vmatpush1.bf16.msra.mxu0 %v1230
          %1352 = vmatprep.subr.bf16.mxu0 0
          %1353 = vmatpush1.bf16.msra.mxu0 %v1231
          %1354 = vmatprep.subr.bf16.mxu0 0
          %1355 = vmatpush1.bf16.msra.mxu0 %v1232
          %1356 = vmatprep.subr.bf16.mxu0 0
          %1357 = vmatpush1.bf16.msra.mxu0 %v1233
          %1358 = vmatprep.subr.bf16.mxu0 0
          %1359 = vmatpush1.bf16.msra.mxu0 %v1234
          %1360 = vmatprep.subr.bf16.mxu0 0
          %1361 = vmatpush1.bf16.msra.mxu0 %v1235
          %1362 = vmatprep.subr.bf16.mxu0 0
          %1363 = vmatpush1.bf16.msra.mxu0 %v1236
          %1364 = vmatprep.subr.bf16.mxu0 0
          %1365 = vmatpush1.bf16.msra.mxu0 %v1237
          %1366 = vmatprep.subr.bf16.mxu0 0
          %1367 = vmatpush1.bf16.msra.mxu0 %v1238
          %1368 = vmatprep.mubr.bf16.mxu0 %v1305
          %1369 = vmatmul.mubr.bf16.gmra.mrb[0].mxu0 %v1304
          %v1370 = vpop.f32.mrb[0].mxu0
          %v1371 = vadd.f32 %v1240, %v1370
          %v1372 = vpop.f32.mrb[0].mxu0
          %v1373 = vpop.f32.mrb[0].mxu0
          %v1374 = vadd.f32 %v1241, %v1373
          %v1375 = vpop.f32.mrb[0].mxu0
          %1376 = vmatprep.mubr.bf16.mxu0 %v1307
          %1377 = vmatmul.mubr.bf16.gmra.mrb[0].mxu0 %v1306
          %v1378 = vpop.f32.mrb[0].mxu0
          %v1379 = vadd.f32 %v1242, %v1378
          %v1380 = vpop.f32.mrb[0].mxu0
          %v1381 = vpop.f32.mrb[0].mxu0
          %v1382 = vadd.f32 %v1243, %v1381
          %v1383 = vpop.f32.mrb[0].mxu0
          %1384 = vmatprep.mubr.bf16.mxu0 %v1309
          %1385 = vmatmul.mubr.bf16.gmra.mrb[0].mxu0 %v1308
          %v1386 = vpop.f32.mrb[0].mxu0
          %v1387 = vadd.f32 %v1244, %v1386
          %v1388 = vpop.f32.mrb[0].mxu0
          %v1389 = vpop.f32.mrb[0].mxu0
          %v1390 = vadd.f32 %v1245, %v1389
          %v1391 = vpop.f32.mrb[0].mxu0
          %1392 = vmatprep.mubr.bf16.mxu0 %v1311
          %1393 = vmatmul.mubr.bf16.gmra.mrb[0].mxu0 %v1310
          %v1394 = vpop.f32.mrb[0].mxu0
          %v1395 = vadd.f32 %v1246, %v1394
          %v1396 = vpop.f32.mrb[0].mxu0
          %v1397 = vpop.f32.mrb[0].mxu0
          %v1398 = vadd.f32 %v1247, %v1397
          %v1399 = vpop.f32.mrb[0].mxu0
          %1400 = vmatprep.mubr.bf16.mxu0 %v1313
          %1401 = vmatmul.mubr.bf16.gmra.mrb[0].mxu0 %v1312
          %v1402 = vpop.f32.mrb[0].mxu0
          %v1403 = vadd.f32 %v1248, %v1402
          %v1404 = vpop.f32.mrb[0].mxu0
          %v1405 = vpop.f32.mrb[0].mxu0
          %v1406 = vadd.f32 %v1249, %v1405
          %v1407 = vpop.f32.mrb[0].mxu0
          %1408 = vmatprep.mubr.bf16.mxu0 %v1315
          %1409 = vmatmul.mubr.bf16.gmra.mrb[0].mxu0 %v1314
          %v1410 = vpop.f32.mrb[0].mxu0
          %v1411 = vadd.f32 %v1250, %v1410
          %v1412 = vpop.f32.mrb[0].mxu0
          %v1413 = vpop.f32.mrb[0].mxu0
          %v1414 = vadd.f32 %v1251, %v1413
          %v1415 = vpop.f32.mrb[0].mxu0
          %1416 = vmatprep.mubr.bf16.mxu0 %v1317
          %1417 = vmatmul.mubr.bf16.gmra.mrb[0].mxu0 %v1316
          %v1418 = vpop.f32.mrb[0].mxu0
          %v1419 = vadd.f32 %v1252, %v1418
          %v1420 = vpop.f32.mrb[0].mxu0
          %v1421 = vpop.f32.mrb[0].mxu0
          %v1422 = vadd.f32 %v1253, %v1421
          %v1423 = vpop.f32.mrb[0].mxu0
          %1424 = vmatprep.mubr.bf16.mxu0 %v1319
          %1425 = vmatmul.mubr.bf16.gmra.mrb[0].mxu0 %v1318
          %v1426 = vpop.f32.mrb[0].mxu0
          %v1427 = vadd.f32 %v1254, %v1426
          %v1428 = vpop.f32.mrb[0].mxu0
          %v1429 = vpop.f32.mrb[0].mxu0
          %v1430 = vadd.f32 %v1255, %v1429
          %v1431 = vpop.f32.mrb[0].mxu0
          %1432 = vdwg.mxu0
          %v1433 = vpack.c.bf16 %v1374, %v1371
          %v1434 = vpack.c.bf16 %v1382, %v1379
          %v1435 = vpack.c.bf16 %v1390, %v1387
          %v1436 = vpack.c.bf16 %v1398, %v1395
          %v1437 = vpack.c.bf16 %v1406, %v1403
          %v1438 = vpack.c.bf16 %v1414, %v1411
          %v1439 = vpack.c.bf16 %v1422, %v1419
          %v1440 = vpack.c.bf16 %v1430, %v1427
          %v1441 = vld [vmem:[%s5] sm:$0xf]
          %v1442 = vld [vmem:[%s5 + $0x4] sm:$0xf]
          %v1443 = vld [vmem:[%s5 + $0x8] sm:$0xf]
          %v1444 = vld [vmem:[%s5 + $0xc] sm:$0xf]
          %v1445 = vld [vmem:[%s5 + $0x10] sm:$0xf]
          %v1446 = vld [vmem:[%s5 + $0x14] sm:$0xf]
          %v1447 = vld [vmem:[%s5 + $0x18] sm:$0xf]
          %v1448 = vld [vmem:[%s5 + $0x1c] sm:$0xf]
          %v1449 = vld [vmem:[%s5 + $0x20] sm:$0xf]
          %v1450 = vld [vmem:[%s5 + $0x24] sm:$0xf]
          %v1451 = vld [vmem:[%s5 + $0x28] sm:$0xf]
          %v1452 = vld [vmem:[%s5 + $0x2c] sm:$0xf]
          %v1453 = vld [vmem:[%s5 + $0x30] sm:$0xf]
          %v1454 = vld [vmem:[%s5 + $0x34] sm:$0xf]
          %v1455 = vld [vmem:[%s5 + $0x38] sm:$0xf]
          %v1456 = vld [vmem:[%s5 + $0x3c] sm:$0xf]
          %v1473 = vunpack.c.l.b16 %v1441
          %v1474 = vunpack.c.l.b16 %v1442
          %v1475 = vunpack.c.l.b16 %v1443
          %v1476 = vunpack.c.l.b16 %v1444
          %v1477 = vunpack.c.l.b16 %v1445
          %v1478 = vunpack.c.l.b16 %v1446
          %v1479 = vunpack.c.l.b16 %v1447
          %v1480 = vunpack.c.l.b16 %v1448
          %v1481 = vunpack.c.l.b16 %v1449
          %v1482 = vunpack.c.l.b16 %v1450
          %v1483 = vunpack.c.l.b16 %v1451
          %v1484 = vunpack.c.l.b16 %v1452
          %v1485 = vunpack.c.l.b16 %v1453
          %v1486 = vunpack.c.l.b16 %v1454
          %v1487 = vunpack.c.l.b16 %v1455
          %v1488 = vunpack.c.l.b16 %v1456
          %v1489 = vpack.c.b16 %v1474, %v1473
          %v1490 = vpack.c.b16 %v1476, %v1475
          %v1491 = vpack.c.b16 %v1478, %v1477
          %v1492 = vpack.c.b16 %v1480, %v1479
          %v1493 = vpack.c.b16 %v1482, %v1481
          %v1494 = vpack.c.b16 %v1484, %v1483
          %v1495 = vpack.c.b16 %v1486, %v1485
          %v1496 = vpack.c.b16 %v1488, %v1487
          %1505 = vmatprep.subr.bf16.mxu0 0
          %1506 = vmatpush1.bf16.msra.mxu0 %v1489
          %1507 = vmatprep.subr.bf16.mxu0 0
          %1508 = vmatpush1.bf16.msra.mxu0 %v1490
          %1509 = vmatprep.subr.bf16.mxu0 0
          %1510 = vmatpush1.bf16.msra.mxu0 %v1491
          %1511 = vmatprep.subr.bf16.mxu0 0
          %1512 = vmatpush1.bf16.msra.mxu0 %v1492
          %1513 = vmatprep.subr.bf16.mxu0 0
          %1514 = vmatpush1.bf16.msra.mxu0 %v1493
          %1515 = vmatprep.subr.bf16.mxu0 0
          %1516 = vmatpush1.bf16.msra.mxu0 %v1494
          %1517 = vmatprep.subr.bf16.mxu0 0
          %1518 = vmatpush1.bf16.msra.mxu0 %v1495
          %1519 = vmatprep.subr.bf16.mxu0 0
          %1520 = vmatpush1.bf16.msra.mxu0 %v1496
          %1521 = vmatprep.subr.bf16.mxu0 0
          %1522 = vmatpush1.bf16.msra.mxu0 0
          %1523 = vmatprep.subr.bf16.mxu0 0
          %1524 = vmatpush1.bf16.msra.mxu0 0
          %1525 = vmatprep.subr.bf16.mxu0 0
          %1526 = vmatpush1.bf16.msra.mxu0 0
          %1527 = vmatprep.subr.bf16.mxu0 0
          %1528 = vmatpush1.bf16.msra.mxu0 0
          %1529 = vmatprep.subr.bf16.mxu0 0
          %1530 = vmatpush1.bf16.msra.mxu0 0
          %1531 = vmatprep.subr.bf16.mxu0 0
          %1532 = vmatpush1.bf16.msra.mxu0 0
          %1533 = vmatprep.subr.bf16.mxu0 0
          %1534 = vmatpush1.bf16.msra.mxu0 0
          %1535 = vmatprep.subr.bf16.mxu0 0
          %1536 = vmatpush1.bf16.msra.mxu0 0
          %1537 = vmatprep.mubr.bf16.mxu0 0
          %1538 = vmatmul.mubr.bf16.gmra.mrb[0].mxu0 %v1433
          %v1539 = vpop.f32.mrb[0].mxu0
          %v1540 = vadd.f32 0.0, %v1539
          %v1541 = vpop.f32.mrb[0].mxu0
          %v1542 = vpop.f32.mrb[0].mxu0
          %v1543 = vadd.f32 0.0, %v1542
          %v1544 = vpop.f32.mrb[0].mxu0
          %1545 = vmatprep.mubr.bf16.mxu0 0
          %1546 = vmatmul.mubr.bf16.gmra.mrb[0].mxu0 %v1434
          %v1547 = vpop.f32.mrb[0].mxu0
          %v1548 = vadd.f32 0.0, %v1547
          %v1549 = vpop.f32.mrb[0].mxu0
          %v1550 = vpop.f32.mrb[0].mxu0
          %v1551 = vadd.f32 0.0, %v1550
          %v1552 = vpop.f32.mrb[0].mxu0
          %1553 = vmatprep.mubr.bf16.mxu0 0
          %1554 = vmatmul.mubr.bf16.gmra.mrb[0].mxu0 %v1435
          %v1555 = vpop.f32.mrb[0].mxu0
          %v1556 = vadd.f32 0.0, %v1555
          %v1557 = vpop.f32.mrb[0].mxu0
          %v1558 = vpop.f32.mrb[0].mxu0
          %v1559 = vadd.f32 0.0, %v1558
          %v1560 = vpop.f32.mrb[0].mxu0
          %1561 = vmatprep.mubr.bf16.mxu0 0
          %1562 = vmatmul.mubr.bf16.gmra.mrb[0].mxu0 %v1436
          %v1563 = vpop.f32.mrb[0].mxu0
          %v1564 = vadd.f32 0.0, %v1563
          %v1565 = vpop.f32.mrb[0].mxu0
          %v1566 = vpop.f32.mrb[0].mxu0
          %v1567 = vadd.f32 0.0, %v1566
          %v1568 = vpop.f32.mrb[0].mxu0
          %1569 = vmatprep.mubr.bf16.mxu0 0
          %1570 = vmatmul.mubr.bf16.gmra.mrb[0].mxu0 %v1437
          %v1571 = vpop.f32.mrb[0].mxu0
          %v1572 = vadd.f32 0.0, %v1571
          %v1573 = vpop.f32.mrb[0].mxu0
          %v1574 = vpop.f32.mrb[0].mxu0
          %v1575 = vadd.f32 0.0, %v1574
          %v1576 = vpop.f32.mrb[0].mxu0
          %1577 = vmatprep.mubr.bf16.mxu0 0
          %1578 = vmatmul.mubr.bf16.gmra.mrb[0].mxu0 %v1438
          %v1579 = vpop.f32.mrb[0].mxu0
          %v1580 = vadd.f32 0.0, %v1579
          %v1581 = vpop.f32.mrb[0].mxu0
          %v1582 = vpop.f32.mrb[0].mxu0
          %v1583 = vadd.f32 0.0, %v1582
          %v1584 = vpop.f32.mrb[0].mxu0
          %1585 = vmatprep.mubr.bf16.mxu0 0
          %1586 = vmatmul.mubr.bf16.gmra.mrb[0].mxu0 %v1439
          %v1587 = vpop.f32.mrb[0].mxu0
          %v1588 = vadd.f32 0.0, %v1587
          %v1589 = vpop.f32.mrb[0].mxu0
          %v1590 = vpop.f32.mrb[0].mxu0
          %v1591 = vadd.f32 0.0, %v1590
          %v1592 = vpop.f32.mrb[0].mxu0
          %1593 = vmatprep.mubr.bf16.mxu0 0
          %1594 = vmatmul.mubr.bf16.gmra.mrb[0].mxu0 %v1440
          %v1595 = vpop.f32.mrb[0].mxu0
          %v1596 = vadd.f32 0.0, %v1595
          %v1597 = vpop.f32.mrb[0].mxu0
          %v1598 = vpop.f32.mrb[0].mxu0
          %v1599 = vadd.f32 0.0, %v1598
          %v1600 = vpop.f32.mrb[0].mxu0
          %1601 = vdwg.mxu0
          %v1602 = vmul.f32 %v1540, %v1540
          %v1603 = vmul.f32 %v1543, %v1543
          %v1604 = vmul.f32 %v1548, %v1548
          %v1605 = vmul.f32 %v1551, %v1551
          %v1606 = vmul.f32 %v1556, %v1556
          %v1607 = vmul.f32 %v1559, %v1559
          %v1608 = vmul.f32 %v1564, %v1564
          %v1609 = vmul.f32 %v1567, %v1567
          %v1610 = vmul.f32 %v1572, %v1572
          %v1611 = vmul.f32 %v1575, %v1575
          %v1612 = vmul.f32 %v1580, %v1580
          %v1613 = vmul.f32 %v1583, %v1583
          %v1614 = vmul.f32 %v1588, %v1588
          %v1615 = vmul.f32 %v1591, %v1591
          %v1616 = vmul.f32 %v1596, %v1596
          %v1617 = vmul.f32 %v1599, %v1599
          %1618 = vadd.xlane.f32.xlu0 %v1602
          %v1619 = vpop.xlane.xlu0 %1618
          %1620 = vadd.xlane.f32.xlu0 %v1603
          %v1621 = vpop.xlane.xlu0 %1620
          %1622 = vadd.xlane.f32.xlu0 %v1604
          %v1623 = vpop.xlane.xlu0 %1622
          %1624 = vadd.xlane.f32.xlu0 %v1605
          %v1625 = vpop.xlane.xlu0 %1624
          %1626 = vadd.xlane.f32.xlu0 %v1606
          %v1627 = vpop.xlane.xlu0 %1626
          %1628 = vadd.xlane.f32.xlu0 %v1607
          %v1629 = vpop.xlane.xlu0 %1628
          %1630 = vadd.xlane.f32.xlu0 %v1608
          %v1631 = vpop.xlane.xlu0 %1630
          %1632 = vadd.xlane.f32.xlu0 %v1609
          %v1633 = vpop.xlane.xlu0 %1632
          %1634 = vadd.xlane.f32.xlu0 %v1610
          %v1635 = vpop.xlane.xlu0 %1634
          %1636 = vadd.xlane.f32.xlu0 %v1611
          %v1637 = vpop.xlane.xlu0 %1636
          %1638 = vadd.xlane.f32.xlu0 %v1612
          %v1639 = vpop.xlane.xlu0 %1638
          %1640 = vadd.xlane.f32.xlu0 %v1613
          %v1641 = vpop.xlane.xlu0 %1640
          %1642 = vadd.xlane.f32.xlu0 %v1614
          %v1643 = vpop.xlane.xlu0 %1642
          %1644 = vadd.xlane.f32.xlu0 %v1615
          %v1645 = vpop.xlane.xlu0 %1644
          %1646 = vadd.xlane.f32.xlu0 %v1616
          %v1647 = vpop.xlane.xlu0 %1646
          %1648 = vadd.xlane.f32.xlu0 %v1617
          %v1649 = vpop.xlane.xlu0 %1648
          %v1650 = vmax.f32 %v1619, 1e-24
          %v1651 = vmax.f32 %v1621, 1e-24
          %v1652 = vmax.f32 %v1623, 1e-24
          %v1653 = vmax.f32 %v1625, 1e-24
          %v1654 = vmax.f32 %v1627, 1e-24
          %v1655 = vmax.f32 %v1629, 1e-24
          %v1656 = vmax.f32 %v1631, 1e-24
          %v1657 = vmax.f32 %v1633, 1e-24
          %v1658 = vmax.f32 %v1635, 1e-24
          %v1659 = vmax.f32 %v1637, 1e-24
          %v1660 = vmax.f32 %v1639, 1e-24
          %v1661 = vmax.f32 %v1641, 1e-24
          %v1662 = vmax.f32 %v1643, 1e-24
          %v1663 = vmax.f32 %v1645, 1e-24
          %v1664 = vmax.f32 %v1647, 1e-24
          %v1665 = vmax.f32 %v1649, 1e-24
          %v1666 = vrsqrt.pop %v1650
          %v1667 = vrsqrt.pop %v1651
          %v1668 = vrsqrt.pop %v1652
          %v1669 = vrsqrt.pop %v1653
          %v1670 = vrsqrt.pop %v1654
          %v1671 = vrsqrt.pop %v1655
          %v1672 = vrsqrt.pop %v1656
          %v1673 = vrsqrt.pop %v1657
          %v1674 = vrsqrt.pop %v1658
          %v1675 = vrsqrt.pop %v1659
          %v1676 = vrsqrt.pop %v1660
          %v1677 = vrsqrt.pop %v1661
          %v1678 = vrsqrt.pop %v1662
          %v1679 = vrsqrt.pop %v1663
          %v1680 = vrsqrt.pop %v1664
          %v1681 = vrsqrt.pop %v1665
          %v1682 = vmul.f32 %v1540, %v1666
          %v1683 = vmul.f32 %v1543, %v1667
          %v1684 = vmul.f32 %v1548, %v1668
          %v1685 = vmul.f32 %v1551, %v1669
          %v1686 = vmul.f32 %v1556, %v1670
          %v1687 = vmul.f32 %v1559, %v1671
          %v1688 = vmul.f32 %v1564, %v1672
          %v1689 = vmul.f32 %v1567, %v1673
          %v1690 = vmul.f32 %v1572, %v1674
          %v1691 = vmul.f32 %v1575, %v1675
          %v1692 = vmul.f32 %v1580, %v1676
          %v1693 = vmul.f32 %v1583, %v1677
          %v1694 = vmul.f32 %v1588, %v1678
          %v1695 = vmul.f32 %v1591, %v1679
          %v1696 = vmul.f32 %v1596, %v1680
          %v1697 = vmul.f32 %v1599, %v1681
          %1698 = vst [vmem:[%s434] sm:$0xff] %v1682
          %1699 = vst [vmem:[%s434 + $0x8] sm:$0xff] %v1683
          %1700 = vst [vmem:[%s434 + $0x10] sm:$0xff] %v1684
          %1701 = vst [vmem:[%s434 + $0x18] sm:$0xff] %v1685
          %1702 = vst [vmem:[%s434 + $0x20] sm:$0xff] %v1686
          %1703 = vst [vmem:[%s434 + $0x28] sm:$0xff] %v1687
          %1704 = vst [vmem:[%s434 + $0x30] sm:$0xff] %v1688
          %1705 = vst [vmem:[%s434 + $0x38] sm:$0xff] %v1689
          %1706 = vst [vmem:[%s434 + $0x40] sm:$0xff] %v1690
          %1707 = vst [vmem:[%s434 + $0x48] sm:$0xff] %v1691
          %1708 = vst [vmem:[%s434 + $0x50] sm:$0xff] %v1692
          %1709 = vst [vmem:[%s434 + $0x58] sm:$0xff] %v1693
          %1710 = vst [vmem:[%s434 + $0x60] sm:$0xff] %v1694
          %1711 = vst [vmem:[%s434 + $0x68] sm:$0xff] %v1695
          %1712 = vst [vmem:[%s434 + $0x70] sm:$0xff] %v1696
          %1713 = vst [vmem:[%s434 + $0x78] sm:$0xff] %v1697
          %v1714 = vpack.c.bf16 %v1683, %v1682
          %v1715 = vpack.c.bf16 %v1685, %v1684
          %v1716 = vpack.c.bf16 %v1687, %v1686
          %v1717 = vpack.c.bf16 %v1689, %v1688
          %v1718 = vpack.c.bf16 %v1691, %v1690
          %v1719 = vpack.c.bf16 %v1693, %v1692
          %v1720 = vpack.c.bf16 %v1695, %v1694
          %v1721 = vpack.c.bf16 %v1697, %v1696
          %v1722 = vld [vmem:[#allocation5] sm:$0xf]
          %v1723 = vld [vmem:[#allocation5 + $0x4] sm:$0xf]
          %v1724 = vld [vmem:[#allocation5 + $0x8] sm:$0xf]
          %v1725 = vld [vmem:[#allocation5 + $0xc] sm:$0xf]
          %v1726 = vld [vmem:[#allocation5 + $0x10] sm:$0xf]
          %v1727 = vld [vmem:[#allocation5 + $0x14] sm:$0xf]
          %v1728 = vld [vmem:[#allocation5 + $0x18] sm:$0xf]
          %v1729 = vld [vmem:[#allocation5 + $0x1c] sm:$0xf]
          %v1730 = vld [vmem:[#allocation5 + $0x20] sm:$0xf]
          %v1731 = vld [vmem:[#allocation5 + $0x24] sm:$0xf]
          %v1732 = vld [vmem:[#allocation5 + $0x28] sm:$0xf]
          %v1733 = vld [vmem:[#allocation5 + $0x2c] sm:$0xf]
          %v1734 = vld [vmem:[#allocation5 + $0x30] sm:$0xf]
          %v1735 = vld [vmem:[#allocation5 + $0x34] sm:$0xf]
          %v1736 = vld [vmem:[#allocation5 + $0x38] sm:$0xf]
          %v1737 = vld [vmem:[#allocation5 + $0x3c] sm:$0xf]
          %v1738 = vld [vmem:[%s7] sm:$0x1]
          %v1740 = vlaneseq
          %v1741 = vshrl.u32 %v1740, 7
          %v1742 = vsub.s32 0, %v1741
          %v1743 = vrot.slane %v1738, %v1742
          %v1761 = vunpack.c.l.b16 %v1722
          %v1762 = vunpack.c.l.b16 %v1723
          %v1763 = vunpack.c.l.b16 %v1724
          %v1764 = vunpack.c.l.b16 %v1725
          %v1765 = vunpack.c.l.b16 %v1726
          %v1766 = vunpack.c.l.b16 %v1727
          %v1767 = vunpack.c.l.b16 %v1728
          %v1768 = vunpack.c.l.b16 %v1729
          %v1769 = vunpack.c.l.b16 %v1730
          %v1770 = vunpack.c.l.b16 %v1731
          %v1771 = vunpack.c.l.b16 %v1732
          %v1772 = vunpack.c.l.b16 %v1733
          %v1773 = vunpack.c.l.b16 %v1734
          %v1774 = vunpack.c.l.b16 %v1735
          %v1775 = vunpack.c.l.b16 %v1736
          %v1776 = vunpack.c.l.b16 %v1737
          %v1777 = vpack.c.b16 %v1762, %v1761
          %v1778 = vpack.c.b16 %v1764, %v1763
          %v1779 = vpack.c.b16 %v1766, %v1765
          %v1780 = vpack.c.b16 %v1768, %v1767
          %v1781 = vpack.c.b16 %v1770, %v1769
          %v1782 = vpack.c.b16 %v1772, %v1771
          %v1783 = vpack.c.b16 %v1774, %v1773
          %v1784 = vpack.c.b16 %v1776, %v1775
          %1793 = vmatprep.subr.bf16.mxu0 0
          %1794 = vmatpush1.bf16.msra.mxu0 %v1777
          %1795 = vmatprep.subr.bf16.mxu0 0
          %1796 = vmatpush1.bf16.msra.mxu0 %v1778
          %1797 = vmatprep.subr.bf16.mxu0 0
          %1798 = vmatpush1.bf16.msra.mxu0 %v1779
          %1799 = vmatprep.subr.bf16.mxu0 0
          %1800 = vmatpush1.bf16.msra.mxu0 %v1780
          %1801 = vmatprep.subr.bf16.mxu0 0
          %1802 = vmatpush1.bf16.msra.mxu0 %v1781
          %1803 = vmatprep.subr.bf16.mxu0 0
          %1804 = vmatpush1.bf16.msra.mxu0 %v1782
          %1805 = vmatprep.subr.bf16.mxu0 0
          %1806 = vmatpush1.bf16.msra.mxu0 %v1783
          %1807 = vmatprep.subr.bf16.mxu0 0
          %1808 = vmatpush1.bf16.msra.mxu0 %v1784
          %1809 = vmatprep.subr.bf16.mxu0 0
          %1810 = vmatpush1.bf16.msra.mxu0 0
          %1811 = vmatprep.subr.bf16.mxu0 0
          %1812 = vmatpush1.bf16.msra.mxu0 0
          %1813 = vmatprep.subr.bf16.mxu0 0
          %1814 = vmatpush1.bf16.msra.mxu0 0
          %1815 = vmatprep.subr.bf16.mxu0 0
          %1816 = vmatpush1.bf16.msra.mxu0 0
          %1817 = vmatprep.subr.bf16.mxu0 0
          %1818 = vmatpush1.bf16.msra.mxu0 0
          %1819 = vmatprep.subr.bf16.mxu0 0
          %1820 = vmatpush1.bf16.msra.mxu0 0
          %1821 = vmatprep.subr.bf16.mxu0 0
          %1822 = vmatpush1.bf16.msra.mxu0 0
          %1823 = vmatprep.subr.bf16.mxu0 0
          %1824 = vmatpush1.bf16.msra.mxu0 0
          %1825 = vmatprep.mubr.bf16.mxu0 0
          %1826 = vmatmul.mubr.bf16.gmra.mrb[0].mxu0 %v1714
          %v1827 = vpop.f32.mrb[0].mxu0
          %v1828 = vadd.f32 %v1743, %v1827
          %v1829 = vpop.f32.mrb[0].mxu0
          %v1830 = vpop.f32.mrb[0].mxu0
          %v1831 = vadd.f32 %v1743, %v1830
          %v1832 = vpop.f32.mrb[0].mxu0
          %1833 = vmatprep.mubr.bf16.mxu0 0
          %1834 = vmatmul.mubr.bf16.gmra.mrb[0].mxu0 %v1715
          %v1835 = vpop.f32.mrb[0].mxu0
          %v1836 = vadd.f32 %v1743, %v1835
          %v1837 = vpop.f32.mrb[0].mxu0
          %v1838 = vpop.f32.mrb[0].mxu0
          %v1839 = vadd.f32 %v1743, %v1838
          %v1840 = vpop.f32.mrb[0].mxu0
          %1841 = vmatprep.mubr.bf16.mxu0 0
          %1842 = vmatmul.mubr.bf16.gmra.mrb[0].mxu0 %v1716
          %v1843 = vpop.f32.mrb[0].mxu0
          %v1844 = vadd.f32 %v1743, %v1843
          %v1845 = vpop.f32.mrb[0].mxu0
          %v1846 = vpop.f32.mrb[0].mxu0
          %v1847 = vadd.f32 %v1743, %v1846
          %v1848 = vpop.f32.mrb[0].mxu0
          %1849 = vmatprep.mubr.bf16.mxu0 0
          %1850 = vmatmul.mubr.bf16.gmra.mrb[0].mxu0 %v1717
          %v1851 = vpop.f32.mrb[0].mxu0
          %v1852 = vadd.f32 %v1743, %v1851
          %v1853 = vpop.f32.mrb[0].mxu0
          %v1854 = vpop.f32.mrb[0].mxu0
          %v1855 = vadd.f32 %v1743, %v1854
          %v1856 = vpop.f32.mrb[0].mxu0
          %1857 = vmatprep.mubr.bf16.mxu0 0
          %1858 = vmatmul.mubr.bf16.gmra.mrb[0].mxu0 %v1718
          %v1859 = vpop.f32.mrb[0].mxu0
          %v1860 = vadd.f32 %v1743, %v1859
          %v1861 = vpop.f32.mrb[0].mxu0
          %v1862 = vpop.f32.mrb[0].mxu0
          %v1863 = vadd.f32 %v1743, %v1862
          %v1864 = vpop.f32.mrb[0].mxu0
          %1865 = vmatprep.mubr.bf16.mxu0 0
          %1866 = vmatmul.mubr.bf16.gmra.mrb[0].mxu0 %v1719
          %v1867 = vpop.f32.mrb[0].mxu0
          %v1868 = vadd.f32 %v1743, %v1867
          %v1869 = vpop.f32.mrb[0].mxu0
          %v1870 = vpop.f32.mrb[0].mxu0
          %v1871 = vadd.f32 %v1743, %v1870
          %v1872 = vpop.f32.mrb[0].mxu0
          %1873 = vmatprep.mubr.bf16.mxu0 0
          %1874 = vmatmul.mubr.bf16.gmra.mrb[0].mxu0 %v1720
          %v1875 = vpop.f32.mrb[0].mxu0
          %v1876 = vadd.f32 %v1743, %v1875
          %v1877 = vpop.f32.mrb[0].mxu0
          %v1878 = vpop.f32.mrb[0].mxu0
          %v1879 = vadd.f32 %v1743, %v1878
          %v1880 = vpop.f32.mrb[0].mxu0
          %1881 = vmatprep.mubr.bf16.mxu0 0
          %1882 = vmatmul.mubr.bf16.gmra.mrb[0].mxu0 %v1721
          %v1883 = vpop.f32.mrb[0].mxu0
          %v1884 = vadd.f32 %v1743, %v1883
          %v1885 = vpop.f32.mrb[0].mxu0
          %v1886 = vpop.f32.mrb[0].mxu0
          %v1887 = vadd.f32 %v1743, %v1886
          %v1888 = vpop.f32.mrb[0].mxu0
          %1889 = vdwg.mxu0
          %1890 = vst [vmem:[%s441] sm:$0xff] %v1828
          %1891 = vst [vmem:[%s441 + $0x8] sm:$0xff] %v1831
          %1892 = vst [vmem:[%s441 + $0x10] sm:$0xff] %v1836
          %1893 = vst [vmem:[%s441 + $0x18] sm:$0xff] %v1839
          %1894 = vst [vmem:[%s441 + $0x20] sm:$0xff] %v1844
          %1895 = vst [vmem:[%s441 + $0x28] sm:$0xff] %v1847
          %1896 = vst [vmem:[%s441 + $0x30] sm:$0xff] %v1852
          %1897 = vst [vmem:[%s441 + $0x38] sm:$0xff] %v1855
          %1898 = vst [vmem:[%s441 + $0x40] sm:$0xff] %v1860
          %1899 = vst [vmem:[%s441 + $0x48] sm:$0xff] %v1863
          %1900 = vst [vmem:[%s441 + $0x50] sm:$0xff] %v1868
          %1901 = vst [vmem:[%s441 + $0x58] sm:$0xff] %v1871
          %1902 = vst [vmem:[%s441 + $0x60] sm:$0xff] %v1876
          %1903 = vst [vmem:[%s441 + $0x68] sm:$0xff] %v1879
          %1904 = vst [vmem:[%s441 + $0x70] sm:$0xff] %v1884
          %1905 = vst [vmem:[%s441 + $0x78] sm:$0xff] %v1887
        $region68: #{gcn2_forward.1} parent=51 // pred_fallthru
          _
        %s1906 = sand.u32 %s251, 1
        %s1907 = scalar_lea.sflag [#allocation7], %s1906
        %s1908 = sand.u32 %s251, 1
        %s1909 = smul.addr %s1908, 128
        %s1910 = scalar_lea.vmem [#allocation8], %s1909
        %s1911 = sand.u32 %s283, 1
        %s1912 = scalar_lea.sflag [#allocation10], %s1911
        %s1913 = sand.u32 %s283, 1
        %s1914 = smul.addr %s1913, 128
        %s1915 = scalar_lea.vmem [#allocation9], %s1914
        // Predicated region
        $region69: #{gcn2_forward.1} parent=51 // pred_check
          %p1916 = pneg %p261
        $region70: #{gcn2_forward.1} parent=51 // pred_check_branch
          %1918 = sbr.rel (%p1916) target = $region72
        $region71: #{gcn2_forward.1} parent=51 // pred_region
          %p1919 = scmp.eq.s32.totalorder %s34, 2
          %s1920 = scalar_select %p1919, %s35, 0
          %s1921 = smul.u32 16, %s1920
          %s1923 = ssub.s32 2048, 2048
          %1924 = vsyncadd %s1907, %s1923
          %s1925 = smul.addr %s33, 32
          %s1926 = sadd.s32 %s1921, %s1925
          %s1927 = smul.addr %s1926, 128
          %s1928 = scalar_lea.hbm %s8, %s1927
          %s1929 = sshll.u32 %s1910, 4
          %s1930 = int_to_ptr.vmem [resolvable:$true] %s1929
          %1935 = dma.vmem_to_hbm [thread:$0]  %s1930, 2048, %s1928, %s1907, 128, 128, 8
        $region72: #{gcn2_forward.1} parent=51 // pred_fallthru
          _
        // Predicated region
        $region73: #{gcn2_forward.1} parent=51 // pred_check
          %p1936 = pneg %p293
        $region74: #{gcn2_forward.1} parent=51 // pred_check_branch
          %1938 = sbr.rel (%p1936) target = $region76
        $region75: #{gcn2_forward.1} parent=51 // pred_region
          %p1939 = scmp.eq.s32.totalorder %s34, 2
          %s1940 = scalar_select %p1939, %s35, 0
          %s1941 = smul.u32 16, %s1940
          %s1943 = ssub.s32 2048, 2048
          %1944 = vsyncadd %s1912, %s1943
          %s1945 = smul.addr %s33, 32
          %s1946 = sadd.s32 %s1941, %s1945
          %s1947 = smul.addr %s1946, 128
          %s1948 = scalar_lea.hbm %s9, %s1947
          %s1949 = sshll.u32 %s1915, 4
          %s1950 = int_to_ptr.vmem [resolvable:$true] %s1949
          %1955 = dma.vmem_to_hbm [thread:$0]  %s1950, 2048, %s1948, %s1912, 128, 128, 8
        $region76: #{gcn2_forward.1} parent=51 // pred_fallthru
          _
      $region52: #{gcn2_forward.1} parent=5 // pred_fallthru
        _
      %p1956 = scmp.le.s32.totalorder 2, %s23
      // Predicated region
      $region77: #{gcn2_forward.1} parent=5 // pred_check
        %p1957 = pneg %p1956
      $region78: #{gcn2_forward.1} parent=5 // pred_check_branch
        %1959 = sbr.rel (%p1957) target = $region80
      $region79: #{gcn2_forward.1} parent=5 // pred_region
        %s1960 = ssub.s32 %s23, 2
        // Predicated region
        $region81: #{gcn2_forward.1} parent=79 // pred_check
          %p1961 = pneg %p267
        $region82: #{gcn2_forward.1} parent=79 // pred_check_branch
          %1963 = sbr.rel (%p1961) target = $region84
        $region83: #{gcn2_forward.1} parent=79 // pred_region
          %s1964 = sand.u32 %s252, 1
          %s1965 = scalar_lea.sflag [#allocation7], %s1964
          %s1966 = sand.u32 %s252, 1
          %s1967 = smul.addr %s1966, 128
          %s1968 = scalar_lea.vmem [#allocation8], %s1967
          %1969 = dma.done %s1965, 2048
        $region84: #{gcn2_forward.1} parent=79 // pred_fallthru
          _
        // Predicated region
        $region85: #{gcn2_forward.1} parent=79 // pred_check
          %p1970 = pneg %p299
        $region86: #{gcn2_forward.1} parent=79 // pred_check_branch
          %1972 = sbr.rel (%p1970) target = $region88
        $region87: #{gcn2_forward.1} parent=79 // pred_region
          %s1973 = sand.u32 %s284, 1
          %s1974 = scalar_lea.sflag [#allocation10], %s1973
          %s1975 = sand.u32 %s284, 1
          %s1976 = smul.addr %s1975, 128
          %s1977 = scalar_lea.vmem [#allocation9], %s1976
          %1978 = dma.done %s1974, 2048
        $region88: #{gcn2_forward.1} parent=79 // pred_fallthru
          _
      $region80: #{gcn2_forward.1} parent=5 // pred_fallthru
        _
    $region6: #{gcn2_forward.1} parent=1 // loop_footer
      %s27 = sadd.s32 1, %s23
    $region7: #{gcn2_forward.1} parent=1 // loop_footer_branch
      %22 = sbr.rel target = $region3
    $region8: #{gcn2_forward.1} parent=1 // loop_exit
      _
    %1979 = vsyncpa [#allocation6], 1
    %s1980 = scalar_lea.sflag [#allocation6], 1
    %1981 = vsyncpa %s1980, 1
    %1982 = vsyncpa [#allocation7], 1
    %s1983 = scalar_lea.sflag [#allocation7], 1
    %1984 = vsyncpa %s1983, 1
    %1985 = vsyncpa [#allocation10], 1
    %s1986 = scalar_lea.sflag [#allocation10], 1
    %1987 = vsyncpa %s1986, 1

</llo_original>
